<compile_context>
chip_gen: v5e
topology: v5e:2x2
jax: 0.10.0
libtpu: 0.0.40
codegen_flags: <defaults>
</compile_context>

<pallas_src>
import math
from functools import partial

import jax
import jax.numpy as jnp
from jax.experimental import pallas as pl
from jax.experimental.pallas import tpu as pltpu

NEG_INF = -1e30  # stands in for float('-inf') in the causal mask; identical post-softmax


def _layer_norm(x, w, b, eps=1e-5):
    mu = jnp.mean(x, axis=-1, keepdims=True)
    xc = x - mu
    var = jnp.mean(xc * xc, axis=-1, keepdims=True)
    return xc * jax.lax.rsqrt(var + eps) * w + b


# --------------------------------------------------------------------------------------
# Pallas kernel: grid = (batch_tiles, nlayers); one grid step = one encoder layer on one
# batch tile.  Residual stream lives in a VMEM scratch across the layer axis.
# --------------------------------------------------------------------------------------
def critic_kernel(nhead,
                  x_ref, enc_w_ref, enc_b_ref, qkv_w_ref, qkv_b_ref, out_w_ref,
                  ff1_w_ref, ff1_b_ref, ff2_w_ref, misc_ref, dec_w_ref, dec_b_ref,
                  res_w_ref, res_b_ref,
                  out_ref,
                  h_scr, attn_scr):
    f32, bf16 = jnp.float32, jnp.bfloat16
    l = pl.program_id(1)
    bt, S, ntoken = x_ref.shape
    D = enc_w_ref.shape[1]
    H = nhead
    Dh = D // H
    d_out = dec_w_ref.shape[1]

    # ---- layer 0: input encoder Linear(ntoken -> D) * sqrt(D) into the resident scratch
    @pl.when(l == 0)
    def _encode():
        x2d = x_ref[...].reshape(bt * S, ntoken).astype(bf16)
        h0 = jnp.dot(x2d, enc_w_ref[...], preferred_element_type=f32)
        h_scr[...] = (h0 + enc_b_ref[...]) * math.sqrt(D)

    h = h_scr[...]                                        # [bt*S, D] f32 residual stream

    misc = misc_ref[...]                                  # [6, D] packed per-layer vectors
    out_b, ln1_w, ln1_b = misc[0:1], misc[1:2], misc[2:3]
    ff2_b, ln2_w, ln2_b = misc[3:4], misc[4:5], misc[5:6]

    # ---- causal mask (built in-kernel, broadcast hoisted out of the head loop)
    row = jax.lax.broadcasted_iota(jnp.int32, (S, S), 0)
    col = jax.lax.broadcasted_iota(jnp.int32, (S, S), 1)
    mask_b = jnp.broadcast_to(jnp.where(col > row, f32(NEG_INF), f32(0.0)), (bt, S, S))

    # ---- fused, lane-dense QKV projection: one [bt*S, D] @ [D, 3D] bf16 matmul
    qkv = jnp.dot(h.astype(bf16), qkv_w_ref[...],
                  preferred_element_type=f32) + qkv_b_ref[...]
    q = qkv[:, :D] * (1.0 / math.sqrt(Dh))
    k = qkv[:, D:2 * D]
    v = qkv[:, 2 * D:]

    # ---- multi-head causal self-attention: short static loop over lane views per head
    for i in range(H):
        sl = slice(i * Dh, (i + 1) * Dh)
        qh = q[:, sl].reshape(bt, S, Dh).astype(bf16)
        kh = k[:, sl].reshape(bt, S, Dh).astype(bf16)
        vh = v[:, sl].reshape(bt, S, Dh).astype(bf16)
        s = jnp.einsum('bqd,bkd->bqk', qh, kh, preferred_element_type=f32) + mask_b
        m = jnp.max(s, axis=-1, keepdims=True)                       # softmax stats in f32
        e = jnp.exp(s - m)
        a = e * pl.reciprocal(jnp.sum(e, axis=-1, keepdims=True), approx=True)
        o = jnp.einsum('bqk,bkd->bqd', a.astype(bf16), vh, preferred_element_type=f32)
        attn_scr[:, sl] = o.reshape(bt * S, Dh)           # head-major lane assembly

    # ---- single full-K output projection [bt*S, D] @ [D, D]
    attn = jnp.dot(attn_scr[...].astype(bf16), out_w_ref[...],
                   preferred_element_type=f32) + out_b
    h = _layer_norm(h + attn, ln1_w, ln1_b)

    # ---- feed-forward (ReLU), bf16 matmuls / f32 accumulation
    ff = jnp.dot(h.astype(bf16), ff1_w_ref[...],
                 preferred_element_type=f32) + ff1_b_ref[...]
    ff = jnp.maximum(ff, 0.0)
    ff = jnp.dot(ff.astype(bf16), ff2_w_ref[...], preferred_element_type=f32) + ff2_b
    h = _layer_norm(h + ff, ln2_w, ln2_b)
    h_scr[...] = h

    # ---- last layer: decoder (D -> d_out), sparse head (S*d_out -> d_out), exact sigmoid
    @pl.when(l == pl.num_programs(1) - 1)
    def _decode():
        dec = jnp.dot(h.astype(bf16), dec_w_ref[...],
                      preferred_element_type=f32) + dec_b_ref[...]        # [bt*S, d_out]
        flat = dec.reshape(bt, S * d_out)
        pre = jnp.dot(flat, res_w_ref[...], preferred_element_type=f32) + res_b_ref[...]
        out_ref[...] = 1.0 / (1.0 + jnp.exp(-pre))        # exact sigmoid (f32)


def _vmem_limit_bytes():
    """Generation-aware VMEM limit: ~3/4 of physical capacity, capped below 128 MiB."""
    try:
        cap = int(pltpu.get_tpu_info().vmem_capacity_bytes)
    except Exception:
        cap = 128 << 20
    return int(min(cap * 3 // 4, 112 << 20))


def critic_forward(x, kparams, nhead, batch_tile=None):
    B, S, ntoken = x.shape
    D = kparams['enc_w'].shape[1]
    d_hid = kparams['ff1_w'].shape[2]
    L = kparams['qkv_w'].shape[0]
    d_out = kparams['dec_w'].shape[1]
    bt = B if batch_tile is None else batch_tile          # megacore: multiple of 8 dividing B
    nb = pl.cdiv(B, bt)

    in_specs = [
        pl.BlockSpec((bt, S, ntoken),    lambda b, l: (b, 0, 0)),   # x
        pl.BlockSpec((ntoken, D),        lambda b, l: (0, 0)),      # enc_w (bf16)
        pl.BlockSpec((1, D),             lambda b, l: (0, 0)),      # enc_b
        pl.BlockSpec((None, D, 3 * D),   lambda b, l: (l, 0, 0)),   # qkv_w (bf16), per layer
        pl.BlockSpec((None, 1, 3 * D),   lambda b, l: (l, 0, 0)),   # qkv_b
        pl.BlockSpec((None, D, D),       lambda b, l: (l, 0, 0)),   # out_w (bf16)
        pl.BlockSpec((None, D, d_hid),   lambda b, l: (l, 0, 0)),   # ff1_w (bf16)
        pl.BlockSpec((None, 1, d_hid),   lambda b, l: (l, 0, 0)),   # ff1_b
        pl.BlockSpec((None, d_hid, D),   lambda b, l: (l, 0, 0)),   # ff2_w (bf16)
        pl.BlockSpec((None, 6, D),       lambda b, l: (l, 0, 0)),   # misc slab (f32)
        pl.BlockSpec((D, d_out),         lambda b, l: (0, 0)),      # dec_w (bf16)
        pl.BlockSpec((1, d_out),         lambda b, l: (0, 0)),      # dec_b
        pl.BlockSpec((S * d_out, d_out), lambda b, l: (0, 0)),      # res_w
        pl.BlockSpec((1, d_out),         lambda b, l: (0, 0)),      # res_b
    ]

    grid_spec = pltpu.PrefetchScalarGridSpec(
        num_scalar_prefetch=0,
        grid=(nb, L),
        in_specs=in_specs,
        out_specs=pl.BlockSpec((bt, d_out), lambda b, l: (b, 0)),
        scratch_shapes=[pltpu.VMEM((bt * S, D), jnp.float32),       # residual stream h
                        pltpu.VMEM((bt * S, D), jnp.float32)],      # head-output assembly
    )

    fn = pl.pallas_call(
        partial(critic_kernel, nhead),
        out_shape=jax.ShapeDtypeStruct((B, d_out), jnp.float32),
        grid_spec=grid_spec,
        compiler_params=pltpu.CompilerParams(
            dimension_semantics=("parallel", "arbitrary"),
            vmem_limit_bytes=_vmem_limit_bytes()),
    )
    args = (x, kparams['enc_w'], kparams['enc_b'], kparams['qkv_w'], kparams['qkv_b'],
            kparams['out_w'], kparams['ff1_w'], kparams['ff1_b'], kparams['ff2_w'],
            kparams['misc'], kparams['dec_w'], kparams['dec_b'],
            kparams['res_w'], kparams['res_b'])
    return fn(*args)


# --------------------------------------------------------------------------------------
# Host-side parameter preparation (layout plumbing + bf16 weight cast, done once)
# --------------------------------------------------------------------------------------
def prepare_kernel_params(p):
    bf16 = jnp.bfloat16
    kp = {}
    kp['enc_w'] = p['enc_w'].astype(bf16)                 # [ntoken, D]
    kp['enc_b'] = p['enc_b']                              # [1, D]
    kp['qkv_w'] = p['qkv_w'].astype(bf16)                 # [L, D, 3D]  (fused, lane-dense)
    kp['qkv_b'] = p['qkv_b']                              # [L, 1, 3D]
    kp['out_w'] = p['out_w'].astype(bf16)                 # [L, D, D]
    kp['ff1_w'] = p['ff1_w'].astype(bf16)                 # [L, D, d_hid]
    kp['ff1_b'] = p['ff1_b']                              # [L, 1, d_hid]
    kp['ff2_w'] = p['ff2_w'].astype(bf16)                 # [L, d_hid, D]
    # Pack the remaining tiny per-layer vectors into one [L, 6, D] slab.
    kp['misc'] = jnp.concatenate(
        [p['out_b'], p['ln1_w'], p['ln1_b'], p['ff2_b'], p['ln2_w'], p['ln2_b']], axis=1)
    kp['dec_w'] = p['dec_w'].astype(bf16)                 # [D, d_out]
    kp['dec_b'] = p['dec_b']                              # [1, d_out]
    kp['res_w'] = p['res_w']                              # [S*d_out, d_out] (tiny, f32)
    kp['res_b'] = p['res_b']                              # [1, d_out]
    return kp


def make_params(key, ntoken, d_model, nhead, d_hid, nlayers, d_output, seq_len):
    """Deterministic synthetic parameters in PyTorch-like ([fan_in, fan_out]) layout."""
    it = iter(jax.random.split(key, 64))

    def u(shape, fan_in):
        b = 1.0 / math.sqrt(fan_in)
        return jax.random.uniform(next(it), shape, jnp.float32, -b, b)

    def stack(fn):
        return jnp.stack([fn() for _ in range(nlayers)])

    p = {}
    p['enc_w'] = u((ntoken, d_model), ntoken)
    p['enc_b'] = u((1, d_model), ntoken)
    p['qkv_w'] = stack(lambda: u((d_model, 3 * d_model), d_model))
    p['qkv_b'] = stack(lambda: u((1, 3 * d_model), d_model))
    p['out_w'] = stack(lambda: u((d_model, d_model), d_model))
    p['out_b'] = stack(lambda: u((1, d_model), d_model))
    p['ln1_w'] = stack(lambda: jnp.ones((1, d_model), jnp.float32))
    p['ln1_b'] = stack(lambda: jnp.zeros((1, d_model), jnp.float32))
    p['ff1_w'] = stack(lambda: u((d_model, d_hid), d_model))
    p['ff1_b'] = stack(lambda: u((1, d_hid), d_model))
    p['ff2_w'] = stack(lambda: u((d_hid, d_model), d_hid))
    p['ff2_b'] = stack(lambda: u((1, d_model), d_hid))
    p['ln2_w'] = stack(lambda: jnp.ones((1, d_model), jnp.float32))
    p['ln2_b'] = stack(lambda: jnp.zeros((1, d_model), jnp.float32))
    p['dec_w'] = u((d_model, d_output), d_model)
    p['dec_b'] = u((1, d_output), d_model)
    p['res_w'] = u((seq_len * d_output, d_output), seq_len * d_output)
    p['res_b'] = u((1, d_output), seq_len * d_output)
    return p


# --------------------------------------------------------------------------------------
# Pure-JAX reference (mirrors the PyTorch module structure, all-f32, unfused layout)
# --------------------------------------------------------------------------------------
def reference_forward(x, p, nhead):
    B, S, ntoken = x.shape
    D = p['enc_w'].shape[1]
    L = p['qkv_w'].shape[0]
    Dh = D // nhead
    idx = jnp.arange(S)
    mask = jnp.where(idx[None, :] > idx[:, None], NEG_INF, 0.0).astype(jnp.float32)

    h = (x.reshape(B * S, ntoken) @ p['enc_w'] + p['enc_b']) * math.sqrt(D)
    for l in range(L):
        qkv = (h @ p['qkv_w'][l] + p['qkv_b'][l]).reshape(B, S, 3 * D)
        q, k, v = qkv[..., :D], qkv[..., D:2 * D], qkv[..., 2 * D:]
        heads = []
        for i in range(nhead):
            sl = slice(i * Dh, (i + 1) * Dh)
            s = jnp.einsum('bqd,bkd->bqk', q[..., sl], k[..., sl]) / math.sqrt(Dh) + mask
            a = jax.nn.softmax(s, axis=-1)
            heads.append(jnp.einsum('bqk,bkd->bqd', a, v[..., sl]))
        attn = jnp.concatenate(heads, -1).reshape(B * S, D) @ p['out_w'][l] + p['out_b'][l]
        h = _layer_norm(h + attn, p['ln1_w'][l], p['ln1_b'][l])
        ff = jnp.maximum(h @ p['ff1_w'][l] + p['ff1_b'][l], 0.0)
        ff = ff @ p['ff2_w'][l] + p['ff2_b'][l]
        h = _layer_norm(h + ff, p['ln2_w'][l], p['ln2_b'][l])
    dec = h @ p['dec_w'] + p['dec_b']                 # [B*S, d_out]
    flat = dec.reshape(B, -1)                         # [B, S*d_out]
    pre = flat @ p['res_w'] + p['res_b']
    return jax.nn.sigmoid(pre)


if __name__ == "__main__":
    # Small shapes consistent with the module's forward:
    B, S, ntoken = 2, 8, 16
    d_model, nhead, d_hid, nlayers, d_output = 32, 2, 64, 2, 1

    key = jax.random.PRNGKey(0)
    kx, kp = jax.random.split(key)
    x = jax.random.normal(kx, (B, S, ntoken), jnp.float32)
    params = make_params(kp, ntoken, d_model, nhead, d_hid, nlayers, d_output, S)
    kparams = prepare_kernel_params(params)

    out = critic_forward(x, kparams, nhead)
    out = jax.block_until_ready(out)

    # Reference uses f32 weights in the original PyTorch-style layout, so the check also
    # validates the host-side packing and the bf16-weight / f32-accumulate numerics.
    ref = reference_forward(x, params, nhead)

    assert out.shape == (B, d_output), out.shape
    assert bool(jnp.all(jnp.isfinite(out)))
    # Tolerance accounts for bf16 matmul operands and the approx softmax reciprocal.
    if not jnp.allclose(out, ref, atol=2e-2, rtol=0.0):
        raise AssertionError(f"kernel/reference mismatch: {out} vs {ref}")
    print("KERNEL_OK")
</pallas_src>

<mosaic_0001>
module attributes {stable_mosaic.version = 11 : i64} {
  func.func @critic_kernel(%arg0: i32, %arg1: i32, %arg2: memref<2x8x16xf32, #tpu.memory_space<vmem>>, %arg3: memref<16x32xbf16, #tpu.memory_space<vmem>>, %arg4: memref<1x32xf32, #tpu.memory_space<vmem>>, %arg5: memref<1x32x96xbf16, #tpu.memory_space<vmem>>, %arg6: memref<1x1x96xf32, #tpu.memory_space<vmem>>, %arg7: memref<1x32x32xbf16, #tpu.memory_space<vmem>>, %arg8: memref<1x32x64xbf16, #tpu.memory_space<vmem>>, %arg9: memref<1x1x64xf32, #tpu.memory_space<vmem>>, %arg10: memref<1x64x32xbf16, #tpu.memory_space<vmem>>, %arg11: memref<1x6x32xf32, #tpu.memory_space<vmem>>, %arg12: memref<32x1xbf16, #tpu.memory_space<vmem>>, %arg13: memref<1x1xf32, #tpu.memory_space<vmem>>, %arg14: memref<8x1xf32, #tpu.memory_space<vmem>>, %arg15: memref<1x1xf32, #tpu.memory_space<vmem>>, %arg16: memref<2x1xf32, #tpu.memory_space<vmem>>, %arg17: memref<16x32xf32, #tpu.memory_space<vmem>>, %arg18: memref<16x32xf32, #tpu.memory_space<vmem>>) attributes {dimension_semantics = [#tpu.dimension_semantics<parallel>, #tpu.dimension_semantics<arbitrary>], iteration_bounds = array<i64: 1, 2>, scalar_prefetch = 0 : i64, scratch_operands = 2 : i64, tpu.core_type = #tpu.core_type<tc>, window_params = [{transform_indices = @transform_0, window_bounds = array<i64: 2, 8, 16>}, {pipeline_mode = #tpu.pipeline_mode<synchronous>, transform_indices = @transform_1, window_bounds = array<i64: 16, 32>}, {pipeline_mode = #tpu.pipeline_mode<synchronous>, transform_indices = @transform_2, window_bounds = array<i64: 1, 32>}, {transform_indices = @transform_3, window_bounds = array<i64: 1, 32, 96>}, {transform_indices = @transform_4, window_bounds = array<i64: 1, 1, 96>}, {transform_indices = @transform_5, window_bounds = array<i64: 1, 32, 32>}, {transform_indices = @transform_6, window_bounds = array<i64: 1, 32, 64>}, {transform_indices = @transform_7, window_bounds = array<i64: 1, 1, 64>}, {transform_indices = @transform_8, window_bounds = array<i64: 1, 64, 32>}, {transform_indices = @transform_9, window_bounds = array<i64: 1, 6, 32>}, {pipeline_mode = #tpu.pipeline_mode<synchronous>, transform_indices = @transform_10, window_bounds = array<i64: 32, 1>}, {pipeline_mode = #tpu.pipeline_mode<synchronous>, transform_indices = @transform_11, window_bounds = array<i64: 1, 1>}, {pipeline_mode = #tpu.pipeline_mode<synchronous>, transform_indices = @transform_12, window_bounds = array<i64: 8, 1>}, {pipeline_mode = #tpu.pipeline_mode<synchronous>, transform_indices = @transform_13, window_bounds = array<i64: 1, 1>}, {transform_indices = @transform_14, window_bounds = array<i64: 2, 1>}]} {
    %c0_i32 = arith.constant 0 : i32
    %0 = arith.cmpi eq, %arg1, %c0_i32 : i32
    %1 = arith.extui %0 : i1 to i32
    %c0_i32_0 = arith.constant 0 : i32
    %2 = arith.cmpi ne, %1, %c0_i32_0 : i32
    scf.if %2 {
      %c0_56 = arith.constant 0 : index
      %c0_57 = arith.constant 0 : index
      %c0_58 = arith.constant 0 : index
      %152 = vector.load %arg2[%c0_56, %c0_57, %c0_58] : memref<2x8x16xf32, #tpu.memory_space<vmem>>, vector<2x8x16xf32>
      %153 = vector.shape_cast %152 : vector<2x8x16xf32> to vector<16x16xf32>
      %154 = arith.truncf %153 : vector<16x16xf32> to vector<16x16xbf16>
      %c0_59 = arith.constant 0 : index
      %c0_60 = arith.constant 0 : index
      %155 = vector.load %arg3[%c0_59, %c0_60] : memref<16x32xbf16, #tpu.memory_space<vmem>>, vector<16x32xbf16>
      %cst_61 = arith.constant dense<0.000000e+00> : vector<16x32xf32>
      %156 = tpu.matmul %154, %155, %cst_61 {dimension_numbers = #tpu.dot_dimension_numbers<[1], [0], [0], [1], [0, 0, 1, 1], [], []>} : vector<16x16xbf16>, vector<16x32xbf16>, vector<16x32xf32> -> vector<16x32xf32>
      %c0_62 = arith.constant 0 : index
      %c0_63 = arith.constant 0 : index
      %157 = vector.load %arg4[%c0_62, %c0_63] : memref<1x32xf32, #tpu.memory_space<vmem>>, vector<1x32xf32>
      %158 = vector.broadcast %157 : vector<1x32xf32> to vector<16x32xf32>
      %159 = arith.addf %156, %158 : vector<16x32xf32>
      %cst_64 = arith.constant 5.65685415 : f32
      %160 = vector.broadcast %cst_64 : f32 to vector<16x32xf32>
      %161 = arith.mulf %159, %160 : vector<16x32xf32>
      %c0_65 = arith.constant 0 : index
      %c0_66 = arith.constant 0 : index
      %162 = vector.load %arg17[%c0_65, %c0_66] : memref<16x32xf32, #tpu.memory_space<vmem>>, vector<16x32xf32>
      tpu.vector_store %arg17[%c0_65, %c0_66], %161 {strides = array<i32>} : memref<16x32xf32, #tpu.memory_space<vmem>>, vector<16x32xf32>,
    } else {
    }
    %c0 = arith.constant 0 : index
    %c0_1 = arith.constant 0 : index
    %3 = vector.load %arg17[%c0, %c0_1] : memref<16x32xf32, #tpu.memory_space<vmem>>, vector<16x32xf32>
    %c0_2 = arith.constant 0 : index
    %c0_3 = arith.constant 0 : index
    %c0_4 = arith.constant 0 : index
    %4 = vector.load %arg11[%c0_2, %c0_3, %c0_4] : memref<1x6x32xf32, #tpu.memory_space<vmem>>, vector<1x6x32xf32>
    %5 = vector.shape_cast %4 : vector<1x6x32xf32> to vector<6x32xf32>
    %6 = vector.extract_strided_slice %5 {offsets = [0, 0], sizes = [1, 32], strides = [1, 1]} : vector<6x32xf32> to vector<1x32xf32>
    %7 = vector.extract_strided_slice %5 {offsets = [1, 0], sizes = [1, 32], strides = [1, 1]} : vector<6x32xf32> to vector<1x32xf32>
    %8 = vector.extract_strided_slice %5 {offsets = [2, 0], sizes = [1, 32], strides = [1, 1]} : vector<6x32xf32> to vector<1x32xf32>
    %9 = vector.extract_strided_slice %5 {offsets = [3, 0], sizes = [1, 32], strides = [1, 1]} : vector<6x32xf32> to vector<1x32xf32>
    %10 = vector.extract_strided_slice %5 {offsets = [4, 0], sizes = [1, 32], strides = [1, 1]} : vector<6x32xf32> to vector<1x32xf32>
    %11 = vector.extract_strided_slice %5 {offsets = [5, 0], sizes = [1, 32], strides = [1, 1]} : vector<6x32xf32> to vector<1x32xf32>
    %12 = tpu.iota {dimensions = array<i32: 0>} : vector<8x8xi32>
    %13 = tpu.iota {dimensions = array<i32: 1>} : vector<8x8xi32>
    %14 = arith.cmpi sgt, %13, %12 : vector<8x8xi32>
    %cst = arith.constant -1.000000e+30 : f32
    %cst_5 = arith.constant 0.000000e+00 : f32
    %15 = vector.broadcast %cst : f32 to vector<8x8xf32>
    %16 = vector.broadcast %cst_5 : f32 to vector<8x8xf32>
    %17 = arith.select %14, %15, %16 : vector<8x8xi1>, vector<8x8xf32>
    %18 = vector.shape_cast %17 : vector<8x8xf32> to vector<1x8x8xf32>
    %19 = vector.broadcast %18 : vector<1x8x8xf32> to vector<2x8x8xf32>
    %20 = arith.truncf %3 : vector<16x32xf32> to vector<16x32xbf16>
    %c0_6 = arith.constant 0 : index
    %c0_7 = arith.constant 0 : index
    %c0_8 = arith.constant 0 : index
    %21 = vector.load %arg5[%c0_6, %c0_7, %c0_8] : memref<1x32x96xbf16, #tpu.memory_space<vmem>>, vector<1x32x96xbf16>
    %22 = vector.shape_cast %21 : vector<1x32x96xbf16> to vector<32x96xbf16>
    %cst_9 = arith.constant dense<0.000000e+00> : vector<16x96xf32>
    %23 = tpu.matmul %20, %22, %cst_9 {dimension_numbers = #tpu.dot_dimension_numbers<[1], [0], [0], [1], [0, 0, 1, 1], [], []>} : vector<16x32xbf16>, vector<32x96xbf16>, vector<16x96xf32> -> vector<16x96xf32>
    %c0_10 = arith.constant 0 : index
    %c0_11 = arith.constant 0 : index
    %c0_12 = arith.constant 0 : index
    %24 = vector.load %arg6[%c0_10, %c0_11, %c0_12] : memref<1x1x96xf32, #tpu.memory_space<vmem>>, vector<1x1x96xf32>
    %25 = vector.shape_cast %24 : vector<1x1x96xf32> to vector<1x96xf32>
    %26 = vector.broadcast %25 : vector<1x96xf32> to vector<16x96xf32>
    %27 = arith.addf %23, %26 : vector<16x96xf32>
    %28 = vector.extract_strided_slice %27 {offsets = [0, 0], sizes = [16, 32], strides = [1, 1]} : vector<16x96xf32> to vector<16x32xf32>
    %cst_13 = arith.constant 2.500000e-01 : f32
    %29 = vector.broadcast %cst_13 : f32 to vector<16x32xf32>
    %30 = arith.mulf %28, %29 : vector<16x32xf32>
    %31 = vector.extract_strided_slice %27 {offsets = [0, 32], sizes = [16, 32], strides = [1, 1]} : vector<16x96xf32> to vector<16x32xf32>
    %32 = vector.extract_strided_slice %27 {offsets = [0, 64], sizes = [16, 32], strides = [1, 1]} : vector<16x96xf32> to vector<16x32xf32>
    %33 = vector.extract_strided_slice %30 {offsets = [0, 0], sizes = [16, 16], strides = [1, 1]} : vector<16x32xf32> to vector<16x16xf32>
    %34 = vector.shape_cast %33 : vector<16x16xf32> to vector<2x8x16xf32>
    %35 = arith.truncf %34 : vector<2x8x16xf32> to vector<2x8x16xbf16>
    %36 = vector.extract_strided_slice %31 {offsets = [0, 0], sizes = [16, 16], strides = [1, 1]} : vector<16x32xf32> to vector<16x16xf32>
    %37 = vector.shape_cast %36 : vector<16x16xf32> to vector<2x8x16xf32>
    %38 = arith.truncf %37 : vector<2x8x16xf32> to vector<2x8x16xbf16>
    %39 = vector.extract_strided_slice %32 {offsets = [0, 0], sizes = [16, 16], strides = [1, 1]} : vector<16x32xf32> to vector<16x16xf32>
    %40 = vector.shape_cast %39 : vector<16x16xf32> to vector<2x8x16xf32>
    %41 = arith.truncf %40 : vector<2x8x16xf32> to vector<2x8x16xbf16>
    "tpu.trace_start"() <{level = 10 : i32, message = "bqd,bkd->bqk"}> : () -> ()
    %cst_14 = arith.constant dense<0.000000e+00> : vector<2x8x8xf32>
    %42 = tpu.matmul %35, %38, %cst_14 {dimension_numbers = #tpu.dot_dimension_numbers<[2], [2], [1], [1], [0, 0, 0, 1, 1, 1], [0], [0]>} : vector<2x8x16xbf16>, vector<2x8x16xbf16>, vector<2x8x8xf32> -> vector<2x8x8xf32>
    "tpu.trace_stop"() : () -> ()
    %43 = arith.addf %42, %19 : vector<2x8x8xf32>
    %cst_15 = arith.constant dense<0xFF800000> : vector<2x8xf32>
    %44 = vector.multi_reduction <maximumf>, %43, %cst_15 [2] : vector<2x8x8xf32> to vector<2x8xf32>
    %45 = vector.shape_cast %44 : vector<2x8xf32> to vector<2x8x1xf32>
    %46 = vector.broadcast %45 : vector<2x8x1xf32> to vector<2x8x8xf32>
    %47 = arith.subf %43, %46 : vector<2x8x8xf32>
    %48 = math.exp %47 : vector<2x8x8xf32>
    %cst_16 = arith.constant dense<0.000000e+00> : vector<2x8xf32>
    %49 = vector.multi_reduction <add>, %48, %cst_16 [2] : vector<2x8x8xf32> to vector<2x8xf32>
    %50 = vector.shape_cast %49 : vector<2x8xf32> to vector<2x8x1xf32>
    %51 = tpu.reciprocal %50 {approx = true} : vector<2x8x1xf32> -> vector<2x8x1xf32>
    %52 = vector.broadcast %51 : vector<2x8x1xf32> to vector<2x8x8xf32>
    %53 = arith.mulf %48, %52 : vector<2x8x8xf32>
    %54 = arith.truncf %53 : vector<2x8x8xf32> to vector<2x8x8xbf16>
    "tpu.trace_start"() <{level = 10 : i32, message = "bqk,bkd->bqd"}> : () -> ()
    %cst_17 = arith.constant dense<0.000000e+00> : vector<2x8x16xf32>
    %55 = tpu.matmul %54, %41, %cst_17 {dimension_numbers = #tpu.dot_dimension_numbers<[2], [1], [1], [2], [0, 0, 0, 1, 1, 2], [0], [0]>} : vector<2x8x8xbf16>, vector<2x8x16xbf16>, vector<2x8x16xf32> -> vector<2x8x16xf32>
    "tpu.trace_stop"() : () -> ()
    %56 = vector.shape_cast %55 : vector<2x8x16xf32> to vector<16x16xf32>
    %c0_18 = arith.constant 0 : index
    %c0_19 = arith.constant 0 : index
    %57 = vector.load %arg18[%c0_18, %c0_19] : memref<16x32xf32, #tpu.memory_space<vmem>>, vector<16x16xf32>
    tpu.vector_store %arg18[%c0_18, %c0_19], %56 {strides = array<i32>} : memref<16x32xf32, #tpu.memory_space<vmem>>, vector<16x16xf32>,
    %58 = vector.extract_strided_slice %30 {offsets = [0, 16], sizes = [16, 16], strides = [1, 1]} : vector<16x32xf32> to vector<16x16xf32>
    %59 = vector.shape_cast %58 : vector<16x16xf32> to vector<2x8x16xf32>
    %60 = arith.truncf %59 : vector<2x8x16xf32> to vector<2x8x16xbf16>
    %61 = vector.extract_strided_slice %31 {offsets = [0, 16], sizes = [16, 16], strides = [1, 1]} : vector<16x32xf32> to vector<16x16xf32>
    %62 = vector.shape_cast %61 : vector<16x16xf32> to vector<2x8x16xf32>
    %63 = arith.truncf %62 : vector<2x8x16xf32> to vector<2x8x16xbf16>
    %64 = vector.extract_strided_slice %32 {offsets = [0, 16], sizes = [16, 16], strides = [1, 1]} : vector<16x32xf32> to vector<16x16xf32>
    %65 = vector.shape_cast %64 : vector<16x16xf32> to vector<2x8x16xf32>
    %66 = arith.truncf %65 : vector<2x8x16xf32> to vector<2x8x16xbf16>
    "tpu.trace_start"() <{level = 10 : i32, message = "bqd,bkd->bqk"}> : () -> ()
    %cst_20 = arith.constant dense<0.000000e+00> : vector<2x8x8xf32>
    %67 = tpu.matmul %60, %63, %cst_20 {dimension_numbers = #tpu.dot_dimension_numbers<[2], [2], [1], [1], [0, 0, 0, 1, 1, 1], [0], [0]>} : vector<2x8x16xbf16>, vector<2x8x16xbf16>, vector<2x8x8xf32> -> vector<2x8x8xf32>
    "tpu.trace_stop"() : () -> ()
    %68 = arith.addf %67, %19 : vector<2x8x8xf32>
    %cst_21 = arith.constant dense<0xFF800000> : vector<2x8xf32>
    %69 = vector.multi_reduction <maximumf>, %68, %cst_21 [2] : vector<2x8x8xf32> to vector<2x8xf32>
    %70 = vector.shape_cast %69 : vector<2x8xf32> to vector<2x8x1xf32>
    %71 = vector.broadcast %70 : vector<2x8x1xf32> to vector<2x8x8xf32>
    %72 = arith.subf %68, %71 : vector<2x8x8xf32>
    %73 = math.exp %72 : vector<2x8x8xf32>
    %cst_22 = arith.constant dense<0.000000e+00> : vector<2x8xf32>
    %74 = vector.multi_reduction <add>, %73, %cst_22 [2] : vector<2x8x8xf32> to vector<2x8xf32>
    %75 = vector.shape_cast %74 : vector<2x8xf32> to vector<2x8x1xf32>
    %76 = tpu.reciprocal %75 {approx = true} : vector<2x8x1xf32> -> vector<2x8x1xf32>
    %77 = vector.broadcast %76 : vector<2x8x1xf32> to vector<2x8x8xf32>
    %78 = arith.mulf %73, %77 : vector<2x8x8xf32>
    %79 = arith.truncf %78 : vector<2x8x8xf32> to vector<2x8x8xbf16>
    "tpu.trace_start"() <{level = 10 : i32, message = "bqk,bkd->bqd"}> : () -> ()
    %cst_23 = arith.constant dense<0.000000e+00> : vector<2x8x16xf32>
    %80 = tpu.matmul %79, %66, %cst_23 {dimension_numbers = #tpu.dot_dimension_numbers<[2], [1], [1], [2], [0, 0, 0, 1, 1, 2], [0], [0]>} : vector<2x8x8xbf16>, vector<2x8x16xbf16>, vector<2x8x16xf32> -> vector<2x8x16xf32>
    "tpu.trace_stop"() : () -> ()
    %81 = vector.shape_cast %80 : vector<2x8x16xf32> to vector<16x16xf32>
    %c0_24 = arith.constant 0 : index
    %c16 = arith.constant 16 : index
    %82 = vector.load %arg18[%c0_24, %c16] : memref<16x32xf32, #tpu.memory_space<vmem>>, vector<16x16xf32>
    tpu.vector_store %arg18[%c0_24, %c16], %81 {strides = array<i32>} : memref<16x32xf32, #tpu.memory_space<vmem>>, vector<16x16xf32>,
    %c0_25 = arith.constant 0 : index
    %c0_26 = arith.constant 0 : index
    %83 = vector.load %arg18[%c0_25, %c0_26] : memref<16x32xf32, #tpu.memory_space<vmem>>, vector<16x32xf32>
    %84 = arith.truncf %83 : vector<16x32xf32> to vector<16x32xbf16>
    %c0_27 = arith.constant 0 : index
    %c0_28 = arith.constant 0 : index
    %c0_29 = arith.constant 0 : index
    %85 = vector.load %arg7[%c0_27, %c0_28, %c0_29] : memref<1x32x32xbf16, #tpu.memory_space<vmem>>, vector<1x32x32xbf16>
    %86 = vector.shape_cast %85 : vector<1x32x32xbf16> to vector<32x32xbf16>
    %cst_30 = arith.constant dense<0.000000e+00> : vector<16x32xf32>
    %87 = tpu.matmul %84, %86, %cst_30 {dimension_numbers = #tpu.dot_dimension_numbers<[1], [0], [0], [1], [0, 0, 1, 1], [], []>} : vector<16x32xbf16>, vector<32x32xbf16>, vector<16x32xf32> -> vector<16x32xf32>
    %88 = vector.broadcast %6 : vector<1x32xf32> to vector<16x32xf32>
    %89 = arith.addf %87, %88 : vector<16x32xf32>
    %90 = arith.addf %3, %89 : vector<16x32xf32>
    %cst_31 = arith.constant dense<0.000000e+00> : vector<16xf32>
    %91 = vector.multi_reduction <add>, %90, %cst_31 [1] : vector<16x32xf32> to vector<16xf32>
    %92 = vector.shape_cast %91 : vector<16xf32> to vector<16x1xf32>
    %cst_32 = arith.constant 3.200000e+01 : f32
    %93 = vector.broadcast %cst_32 : f32 to vector<16x1xf32>
    %94 = arith.divf %92, %93 : vector<16x1xf32>
    %95 = vector.broadcast %94 : vector<16x1xf32> to vector<16x32xf32>
    %96 = arith.subf %90, %95 : vector<16x32xf32>
    %97 = arith.mulf %96, %96 : vector<16x32xf32>
    %cst_33 = arith.constant dense<0.000000e+00> : vector<16xf32>
    %98 = vector.multi_reduction <add>, %97, %cst_33 [1] : vector<16x32xf32> to vector<16xf32>
    %99 = vector.shape_cast %98 : vector<16xf32> to vector<16x1xf32>
    %cst_34 = arith.constant 3.200000e+01 : f32
    %100 = vector.broadcast %cst_34 : f32 to vector<16x1xf32>
    %101 = arith.divf %99, %100 : vector<16x1xf32>
    %cst_35 = arith.constant 9.99999974E-6 : f32
    %102 = vector.broadcast %cst_35 : f32 to vector<16x1xf32>
    %103 = arith.addf %101, %102 : vector<16x1xf32>
    %104 = math.rsqrt %103 : vector<16x1xf32>
    %105 = vector.broadcast %104 : vector<16x1xf32> to vector<16x32xf32>
    %106 = arith.mulf %96, %105 : vector<16x32xf32>
    %107 = vector.broadcast %7 : vector<1x32xf32> to vector<16x32xf32>
    %108 = arith.mulf %106, %107 : vector<16x32xf32>
    %109 = vector.broadcast %8 : vector<1x32xf32> to vector<16x32xf32>
    %110 = arith.addf %108, %109 : vector<16x32xf32>
    %111 = arith.truncf %110 : vector<16x32xf32> to vector<16x32xbf16>
    %c0_36 = arith.constant 0 : index
    %c0_37 = arith.constant 0 : index
    %c0_38 = arith.constant 0 : index
    %112 = vector.load %arg8[%c0_36, %c0_37, %c0_38] : memref<1x32x64xbf16, #tpu.memory_space<vmem>>, vector<1x32x64xbf16>
    %113 = vector.shape_cast %112 : vector<1x32x64xbf16> to vector<32x64xbf16>
    %cst_39 = arith.constant dense<0.000000e+00> : vector<16x64xf32>
    %114 = tpu.matmul %111, %113, %cst_39 {dimension_numbers = #tpu.dot_dimension_numbers<[1], [0], [0], [1], [0, 0, 1, 1], [], []>} : vector<16x32xbf16>, vector<32x64xbf16>, vector<16x64xf32> -> vector<16x64xf32>
    %c0_40 = arith.constant 0 : index
    %c0_41 = arith.constant 0 : index
    %c0_42 = arith.constant 0 : index
    %115 = vector.load %arg9[%c0_40, %c0_41, %c0_42] : memref<1x1x64xf32, #tpu.memory_space<vmem>>, vector<1x1x64xf32>
    %116 = vector.shape_cast %115 : vector<1x1x64xf32> to vector<1x64xf32>
    %117 = vector.broadcast %116 : vector<1x64xf32> to vector<16x64xf32>
    %118 = arith.addf %114, %117 : vector<16x64xf32>
    %cst_43 = arith.constant 0.000000e+00 : f32
    %119 = vector.broadcast %cst_43 : f32 to vector<16x64xf32>
    %120 = arith.maximumf %118, %119 : vector<16x64xf32>
    %121 = arith.truncf %120 : vector<16x64xf32> to vector<16x64xbf16>
    %c0_44 = arith.constant 0 : index
    %c0_45 = arith.constant 0 : index
    %c0_46 = arith.constant 0 : index
    %122 = vector.load %arg10[%c0_44, %c0_45, %c0_46] : memref<1x64x32xbf16, #tpu.memory_space<vmem>>, vector<1x64x32xbf16>
    %123 = vector.shape_cast %122 : vector<1x64x32xbf16> to vector<64x32xbf16>
    %cst_47 = arith.constant dense<0.000000e+00> : vector<16x32xf32>
    %124 = tpu.matmul %121, %123, %cst_47 {dimension_numbers = #tpu.dot_dimension_numbers<[1], [0], [0], [1], [0, 0, 1, 1], [], []>} : vector<16x64xbf16>, vector<64x32xbf16>, vector<16x32xf32> -> vector<16x32xf32>
    %125 = vector.broadcast %9 : vector<1x32xf32> to vector<16x32xf32>
    %126 = arith.addf %124, %125 : vector<16x32xf32>
    %127 = arith.addf %110, %126 : vector<16x32xf32>
    %cst_48 = arith.constant dense<0.000000e+00> : vector<16xf32>
    %128 = vector.multi_reduction <add>, %127, %cst_48 [1] : vector<16x32xf32> to vector<16xf32>
    %129 = vector.shape_cast %128 : vector<16xf32> to vector<16x1xf32>
    %cst_49 = arith.constant 3.200000e+01 : f32
    %130 = vector.broadcast %cst_49 : f32 to vector<16x1xf32>
    %131 = arith.divf %129, %130 : vector<16x1xf32>
    %132 = vector.broadcast %131 : vector<16x1xf32> to vector<16x32xf32>
    %133 = arith.subf %127, %132 : vector<16x32xf32>
    %134 = arith.mulf %133, %133 : vector<16x32xf32>
    %cst_50 = arith.constant dense<0.000000e+00> : vector<16xf32>
    %135 = vector.multi_reduction <add>, %134, %cst_50 [1] : vector<16x32xf32> to vector<16xf32>
    %136 = vector.shape_cast %135 : vector<16xf32> to vector<16x1xf32>
    %cst_51 = arith.constant 3.200000e+01 : f32
    %137 = vector.broadcast %cst_51 : f32 to vector<16x1xf32>
    %138 = arith.divf %136, %137 : vector<16x1xf32>
    %cst_52 = arith.constant 9.99999974E-6 : f32
    %139 = vector.broadcast %cst_52 : f32 to vector<16x1xf32>
    %140 = arith.addf %138, %139 : vector<16x1xf32>
    %141 = math.rsqrt %140 : vector<16x1xf32>
    %142 = vector.broadcast %141 : vector<16x1xf32> to vector<16x32xf32>
    %143 = arith.mulf %133, %142 : vector<16x32xf32>
    %144 = vector.broadcast %10 : vector<1x32xf32> to vector<16x32xf32>
    %145 = arith.mulf %143, %144 : vector<16x32xf32>
    %146 = vector.broadcast %11 : vector<1x32xf32> to vector<16x32xf32>
    %147 = arith.addf %145, %146 : vector<16x32xf32>
    %c0_53 = arith.constant 0 : index
    %c0_54 = arith.constant 0 : index
    %148 = vector.load %arg17[%c0_53, %c0_54] : memref<16x32xf32, #tpu.memory_space<vmem>>, vector<16x32xf32>
    tpu.vector_store %arg17[%c0_53, %c0_54], %147 {strides = array<i32>} : memref<16x32xf32, #tpu.memory_space<vmem>>, vector<16x32xf32>,
    %c1_i32 = arith.constant 1 : i32
    %149 = arith.cmpi eq, %arg1, %c1_i32 : i32
    %150 = arith.extui %149 : i1 to i32
    %c0_i32_55 = arith.constant 0 : i32
    %151 = arith.cmpi ne, %150, %c0_i32_55 : i32
    scf.if %151 {
      %152 = arith.truncf %147 : vector<16x32xf32> to vector<16x32xbf16>
      %c0_56 = arith.constant 0 : index
      %c0_57 = arith.constant 0 : index
      %153 = vector.load %arg12[%c0_56, %c0_57] : memref<32x1xbf16, #tpu.memory_space<vmem>>, vector<32x1xbf16>
      %cst_58 = arith.constant dense<0.000000e+00> : vector<16x1xf32>
      %154 = tpu.matmul %152, %153, %cst_58 {dimension_numbers = #tpu.dot_dimension_numbers<[1], [0], [0], [1], [0, 0, 1, 1], [], []>} : vector<16x32xbf16>, vector<32x1xbf16>, vector<16x1xf32> -> vector<16x1xf32>
      %c0_59 = arith.constant 0 : index
      %c0_60 = arith.constant 0 : index
      %155 = vector.load %arg13[%c0_59, %c0_60] : memref<1x1xf32, #tpu.memory_space<vmem>>, vector<1x1xf32>
      %156 = vector.broadcast %155 : vector<1x1xf32> to vector<16x1xf32>
      %157 = arith.addf %154, %156 : vector<16x1xf32>
      %158 = vector.shape_cast %157 : vector<16x1xf32> to vector<2x8xf32>
      %c0_61 = arith.constant 0 : index
      %c0_62 = arith.constant 0 : index
      %159 = vector.load %arg14[%c0_61, %c0_62] : memref<8x1xf32, #tpu.memory_space<vmem>>, vector<8x1xf32>
      %cst_63 = arith.constant dense<0.000000e+00> : vector<2x1xf32>
      %160 = tpu.matmul %158, %159, %cst_63 {dimension_numbers = #tpu.dot_dimension_numbers<[1], [0], [0], [1], [0, 0, 1, 1], [], []>} : vector<2x8xf32>, vector<8x1xf32>, vector<2x1xf32> -> vector<2x1xf32>
      %c0_64 = arith.constant 0 : index
      %c0_65 = arith.constant 0 : index
      %161 = vector.load %arg15[%c0_64, %c0_65] : memref<1x1xf32, #tpu.memory_space<vmem>>, vector<1x1xf32>
      %162 = vector.broadcast %161 : vector<1x1xf32> to vector<2x1xf32>
      %163 = arith.addf %160, %162 : vector<2x1xf32>
      %cst_66 = arith.constant 0.000000e+00 : f32
      %164 = vector.broadcast %cst_66 : f32 to vector<2x1xf32>
      %165 = arith.subf %164, %163 : vector<2x1xf32>
      %166 = math.exp %165 : vector<2x1xf32>
      %cst_67 = arith.constant 1.000000e+00 : f32
      %167 = vector.broadcast %cst_67 : f32 to vector<2x1xf32>
      %168 = arith.addf %167, %166 : vector<2x1xf32>
      %cst_68 = arith.constant 1.000000e+00 : f32
      %169 = vector.broadcast %cst_68 : f32 to vector<2x1xf32>
      %170 = arith.divf %169, %168 : vector<2x1xf32>
      %c0_69 = arith.constant 0 : index
      %c0_70 = arith.constant 0 : index
      %171 = vector.load %arg16[%c0_69, %c0_70] : memref<2x1xf32, #tpu.memory_space<vmem>>, vector<2x1xf32>
      tpu.vector_store %arg16[%c0_69, %c0_70], %170 {strides = array<i32>} : memref<2x1xf32, #tpu.memory_space<vmem>>, vector<2x1xf32>,
    } else {
    }
    return
  }
  func.func @transform_0(%arg0: i32, %arg1: i32) -> (i32, i32, i32) {
    %c0_i32 = arith.constant 0 : i32
    %c0_i32_0 = arith.constant 0 : i32
    %c0_i32_1 = arith.constant 0 : i32
    return %arg0, %c0_i32, %c0_i32_0 : i32, i32, i32
  }
  func.func @transform_1(%arg0: i32, %arg1: i32) -> (i32, i32) {
    %c0_i32 = arith.constant 0 : i32
    %c0_i32_0 = arith.constant 0 : i32
    %c0_i32_1 = arith.constant 0 : i32
    return %c0_i32, %c0_i32_0 : i32, i32
  }
  func.func @transform_2(%arg0: i32, %arg1: i32) -> (i32, i32) {
    %c0_i32 = arith.constant 0 : i32
    %c0_i32_0 = arith.constant 0 : i32
    %c0_i32_1 = arith.constant 0 : i32
    return %c0_i32, %c0_i32_0 : i32, i32
  }
  func.func @transform_3(%arg0: i32, %arg1: i32) -> (i32, i32, i32) {
    %c0_i32 = arith.constant 0 : i32
    %c0_i32_0 = arith.constant 0 : i32
    %c0_i32_1 = arith.constant 0 : i32
    return %arg1, %c0_i32, %c0_i32_0 : i32, i32, i32
  }
  func.func @transform_4(%arg0: i32, %arg1: i32) -> (i32, i32, i32) {
    %c0_i32 = arith.constant 0 : i32
    %c0_i32_0 = arith.constant 0 : i32
    %c0_i32_1 = arith.constant 0 : i32
    return %arg1, %c0_i32, %c0_i32_0 : i32, i32, i32
  }
  func.func @transform_5(%arg0: i32, %arg1: i32) -> (i32, i32, i32) {
    %c0_i32 = arith.constant 0 : i32
    %c0_i32_0 = arith.constant 0 : i32
    %c0_i32_1 = arith.constant 0 : i32
    return %arg1, %c0_i32, %c0_i32_0 : i32, i32, i32
  }
  func.func @transform_6(%arg0: i32, %arg1: i32) -> (i32, i32, i32) {
    %c0_i32 = arith.constant 0 : i32
    %c0_i32_0 = arith.constant 0 : i32
    %c0_i32_1 = arith.constant 0 : i32
    return %arg1, %c0_i32, %c0_i32_0 : i32, i32, i32
  }
  func.func @transform_7(%arg0: i32, %arg1: i32) -> (i32, i32, i32) {
    %c0_i32 = arith.constant 0 : i32
    %c0_i32_0 = arith.constant 0 : i32
    %c0_i32_1 = arith.constant 0 : i32
    return %arg1, %c0_i32, %c0_i32_0 : i32, i32, i32
  }
  func.func @transform_8(%arg0: i32, %arg1: i32) -> (i32, i32, i32) {
    %c0_i32 = arith.constant 0 : i32
    %c0_i32_0 = arith.constant 0 : i32
    %c0_i32_1 = arith.constant 0 : i32
    return %arg1, %c0_i32, %c0_i32_0 : i32, i32, i32
  }
  func.func @transform_9(%arg0: i32, %arg1: i32) -> (i32, i32, i32) {
    %c0_i32 = arith.constant 0 : i32
    %c0_i32_0 = arith.constant 0 : i32
    %c0_i32_1 = arith.constant 0 : i32
    return %arg1, %c0_i32, %c0_i32_0 : i32, i32, i32
  }
  func.func @transform_10(%arg0: i32, %arg1: i32) -> (i32, i32) {
    %c0_i32 = arith.constant 0 : i32
    %c0_i32_0 = arith.constant 0 : i32
    %c0_i32_1 = arith.constant 0 : i32
    return %c0_i32, %c0_i32_0 : i32, i32
  }
  func.func @transform_11(%arg0: i32, %arg1: i32) -> (i32, i32) {
    %c0_i32 = arith.constant 0 : i32
    %c0_i32_0 = arith.constant 0 : i32
    %c0_i32_1 = arith.constant 0 : i32
    return %c0_i32, %c0_i32_0 : i32, i32
  }
  func.func @transform_12(%arg0: i32, %arg1: i32) -> (i32, i32) {
    %c0_i32 = arith.constant 0 : i32
    %c0_i32_0 = arith.constant 0 : i32
    %c0_i32_1 = arith.constant 0 : i32
    return %c0_i32, %c0_i32_0 : i32, i32
  }
  func.func @transform_13(%arg0: i32, %arg1: i32) -> (i32, i32) {
    %c0_i32 = arith.constant 0 : i32
    %c0_i32_0 = arith.constant 0 : i32
    %c0_i32_1 = arith.constant 0 : i32
    return %c0_i32, %c0_i32_0 : i32, i32
  }
  func.func @transform_14(%arg0: i32, %arg1: i32) -> (i32, i32) {
    %c0_i32 = arith.constant 0 : i32
    %c0_i32_0 = arith.constant 0 : i32
    return %arg0, %c0_i32 : i32, i32
  }
}

</mosaic_0001>

<llo_original>
// kernel: tpu_custom_call.1
$region0: #{tpu_custom_call.1}
  #allocation0 [shape = 'u32[]', space=smem, size = 0x4, offset = 0x4, fixed_abs, tag = 'smem constant byte address 0x4 - core index']
  #allocation1 [shape = 'u32[72,128]{1,0:T(1,128)}', space=vmem, size = 0x9000, scoped, tag = 'internal scratch']
  #allocation2 [shape = 'f32[16,32]{1,0:T(8,128)}', space=vmem, size = 0x2000, scoped, tag = 'scratch operand']
  #allocation3 [shape = 'f32[16,32]{1,0:T(8,128)}', space=vmem, size = 0x2000, scoped, tag = 'scratch operand']
  #allocation4 [shape = 'f32[1,1]{1,0:T(1,128)S(1)}', space=vmem, size = 0x200, scoped, tag = 'scoped memory for tpu_custom_call.1']
  #allocation5 [shape = 'f32[1,1]{1,0:T(1,128)S(1)}', space=vmem, size = 0x200, scoped, tag = 'scoped memory for tpu_custom_call.1']
  %s0 = inlined_call_operand.vmem [shape: f32[2,8,16], index: 0, kind: input, shape index: {}]
  %s1 = inlined_call_operand.hbm [shape: bf16[16,32], index: 1, kind: input, shape index: {}]
  %s2 = inlined_call_operand.vmem [shape: f32[1,32], index: 2, kind: input, shape index: {}]
  %s3 = inlined_call_operand.vmem [shape: bf16[2,32,96], index: 3, kind: input, shape index: {}]
  %s4 = inlined_call_operand.vmem [shape: f32[2,1,96], index: 4, kind: input, shape index: {}]
  %s5 = inlined_call_operand.vmem [shape: bf16[2,32,32], index: 5, kind: input, shape index: {}]
  %s6 = inlined_call_operand.vmem [shape: bf16[2,32,64], index: 6, kind: input, shape index: {}]
  %s7 = inlined_call_operand.vmem [shape: f32[2,1,64], index: 7, kind: input, shape index: {}]
  %s8 = inlined_call_operand.vmem [shape: bf16[2,64,32], index: 8, kind: input, shape index: {}]
  %s9 = inlined_call_operand.vmem [shape: f32[2,6,32], index: 9, kind: input, shape index: {}]
  %s10 = inlined_call_operand.vmem [shape: bf16[32,1], index: 10, kind: input, shape index: {}]
  %s11 = inlined_call_operand.<no memory space> [shape: f32[1,1], index: 11, kind: input, shape index: {}]
  %s12 = inlined_call_operand.vmem [shape: f32[8,1], index: 12, kind: input, shape index: {}]
  %s13 = inlined_call_operand.<no memory space> [shape: f32[1,1], index: 13, kind: input, shape index: {}]
  %s14 = inlined_call_operand.vmem [shape: f32[2,1], index: 14, kind: output, shape index: {}]
  %s15 = sld [smem:[#allocation0]]
  $region101: #{tpu_custom_call.1} parent=0
    _
  %s17 = ssub.s32 1, %s15
  %s18 = scalar_select 0, %s17, %s15
  %v19 = vstv %s11
  %20 = vst [vmem:[#allocation4] sm:$0x1] %v19
  %v21 = vstv %s13
  %22 = vst [vmem:[#allocation5] sm:$0x1] %v21
  $region1: #{tpu_custom_call.1} parent=0
    #allocation6 [shape = 'u8[4096]{0}', space=vmem, size = 0x1000, scoped, tag = 'input window, operand 1, single buffered']
    #allocation7 [shape = 's32[2]{0}', space=sflag, size = 0x8, scoped, tag = 'scoped memory for tpu_custom_call.1']
    %23 = vsyncpa [#allocation7], 0
    loop: start=0, step=1, limit=4
    $region2: #{tpu_custom_call.1} parent=1 // loop_pre_header
      _
    $region3: #{tpu_custom_call.1} parent=1 // loop_header
      %s25 = sphi 0, %s29
      %p26 = scmp.ge.s32.totalorder %s25, 4
      %s32 = sphi 0, %s44
      %s33 = sphi 0, %s40
      %s34 = sphi 0, %s32
      %s35 = sphi 0, %s33
      %s36 = sphi 0, %s34
      %s37 = sphi 0, %s35
      %s47 = sphi 0, %s49
      %s50 = sphi 0, %s47
      %s51 = sphi 0, %s50
      %s67 = sphi 0, %s51
      %s71 = sphi 0, %s71
      %s73 = sphi 0, %s71
      %s74 = sphi 0, %s73
      %s88 = sphi 0, %s74
      %s92 = sphi 0, %s92
      %s94 = sphi 0, %s92
      %s95 = sphi 0, %s94
      %s109 = sphi 0, %s95
      %s115 = sphi 0, %s117
      %s118 = sphi 0, %s115
      %s119 = sphi 0, %s118
      %s135 = sphi 0, %s119
      %s141 = sphi 0, %s143
      %s144 = sphi 0, %s141
      %s145 = sphi 0, %s144
      %s161 = sphi 0, %s145
      %s167 = sphi 0, %s169
      %s170 = sphi 0, %s167
      %s171 = sphi 0, %s170
      %s187 = sphi 0, %s171
      %s193 = sphi 0, %s195
      %s196 = sphi 0, %s193
      %s197 = sphi 0, %s196
      %s213 = sphi 0, %s197
      %s219 = sphi 0, %s221
      %s222 = sphi 0, %s219
      %s223 = sphi 0, %s222
      %s239 = sphi 0, %s223
      %s245 = sphi 0, %s247
      %s248 = sphi 0, %s245
      %s249 = sphi 0, %s248
      %s265 = sphi 0, %s249
      %s271 = sphi 0, %s273
      %s274 = sphi 0, %s271
      %s275 = sphi 0, %s274
      %s291 = sphi 0, %s275
      %s295 = sphi 0, %s295
      %s297 = sphi 0, %s295
      %s298 = sphi 0, %s297
      %s312 = sphi 0, %s298
      %s316 = sphi 0, %s316
      %s318 = sphi 0, %s316
      %s319 = sphi 0, %s318
      %s333 = sphi 0, %s319
      %s337 = sphi 0, %s337
      %s339 = sphi 0, %s337
      %s340 = sphi 0, %s339
      %s354 = sphi 0, %s340
      %s358 = sphi 0, %s358
      %s360 = sphi 0, %s358
      %s361 = sphi 0, %s360
      %s375 = sphi 0, %s361
      %s381 = sphi 0, %s383
      %s384 = sphi 0, %s381
      %s385 = sphi 0, %s384
      %s401 = sphi 0, %s385
    $region4: #{tpu_custom_call.1} parent=1 // loop_header_branch
      %28 = sbr.rel (%p26) target = $region8
    $region5: #{tpu_custom_call.1} parent=1 // loop_body
      %s30 = ssub.s32 %s25, 1
      %s31 = ssub.s32 %s25, 2
      %s38 = sadd.s32 1, %s33
      %p39 = scmp.ge.s32.totalorder %s38, 2
      %s40 = scalar_select %p39, 0, %s38
      %s41 = sadd.s32 1, %s32
      %s42 = scalar_select %p39, %s41, %s32
      %p43 = scmp.ge.s32.totalorder %s42, 1
      %s44 = scalar_select %p43, 0, %s42
      %s45 = ssub.s32 %s32, %s44
      %p46 = scmp.eq.s32.totalorder %s45, 0
      %s48 = sadd.s32 %s47, 1
      %s49 = scalar_select %p46, %s47, %s48
      %p52 = pneg %p46
      %p53 = scmp.eq.s32.totalorder %s25, 1
      %p54 = por %p52, %p53
      %p55 = scmp.ne.s32.totalorder %s47, %s50
      %p56 = scmp.eq.s32.totalorder %s25, 0
      %p57 = por %p55, %p56
      %p58 = scmp.ne.s32.totalorder %s47, %s50
      %p59 = scmp.eq.s32.totalorder %s30, 1
      %p60 = por %p58, %p59
      %p61 = scmp.ne.s32.totalorder %s50, %s51
      %p62 = scmp.eq.s32.totalorder %s30, 0
      %p63 = por %p61, %p62
      %p64 = scmp.ne.s32.totalorder %s50, %s51
      %p65 = scmp.eq.s32.totalorder %s31, 1
      %p66 = por %p64, %p65
      %p68 = scmp.ne.s32.totalorder %s51, %s67
      %p69 = scmp.eq.s32.totalorder %s31, 0
      %p70 = por %p68, %p69
      %s72 = sadd.s32 %s71, 1
      %p75 = scmp.eq.s32.totalorder %s25, 1
      %p76 = scmp.ne.s32.totalorder %s71, %s73
      %p77 = scmp.eq.s32.totalorder %s25, 0
      %p78 = por %p76, %p77
      %p79 = scmp.ne.s32.totalorder %s71, %s73
      %p80 = scmp.eq.s32.totalorder %s30, 1
      %p81 = por %p79, %p80
      %p82 = scmp.ne.s32.totalorder %s73, %s74
      %p83 = scmp.eq.s32.totalorder %s30, 0
      %p84 = por %p82, %p83
      %p85 = scmp.ne.s32.totalorder %s73, %s74
      %p86 = scmp.eq.s32.totalorder %s31, 1
      %p87 = por %p85, %p86
      %p89 = scmp.ne.s32.totalorder %s74, %s88
      %p90 = scmp.eq.s32.totalorder %s31, 0
      %p91 = por %p89, %p90
      %s93 = sadd.s32 %s92, 1
      %p96 = scmp.eq.s32.totalorder %s25, 1
      %p97 = scmp.ne.s32.totalorder %s92, %s94
      %p98 = scmp.eq.s32.totalorder %s25, 0
      %p99 = por %p97, %p98
      %p100 = scmp.ne.s32.totalorder %s92, %s94
      %p101 = scmp.eq.s32.totalorder %s30, 1
      %p102 = por %p100, %p101
      %p103 = scmp.ne.s32.totalorder %s94, %s95
      %p104 = scmp.eq.s32.totalorder %s30, 0
      %p105 = por %p103, %p104
      %p106 = scmp.ne.s32.totalorder %s94, %s95
      %p107 = scmp.eq.s32.totalorder %s31, 1
      %p108 = por %p106, %p107
      %p110 = scmp.ne.s32.totalorder %s95, %s109
      %p111 = scmp.eq.s32.totalorder %s31, 0
      %p112 = por %p110, %p111
      %s113 = ssub.s32 %s33, %s40
      %p114 = scmp.eq.s32.totalorder %s113, 0
      %s116 = sadd.s32 %s115, 1
      %s117 = scalar_select %p114, %s115, %s116
      %p120 = pneg %p114
      %p121 = scmp.eq.s32.totalorder %s25, 1
      %p122 = por %p120, %p121
      %p123 = scmp.ne.s32.totalorder %s115, %s118
      %p124 = scmp.eq.s32.totalorder %s25, 0
      %p125 = por %p123, %p124
      %p126 = scmp.ne.s32.totalorder %s115, %s118
      %p127 = scmp.eq.s32.totalorder %s30, 1
      %p128 = por %p126, %p127
      %p129 = scmp.ne.s32.totalorder %s118, %s119
      %p130 = scmp.eq.s32.totalorder %s30, 0
      %p131 = por %p129, %p130
      %p132 = scmp.ne.s32.totalorder %s118, %s119
      %p133 = scmp.eq.s32.totalorder %s31, 1
      %p134 = por %p132, %p133
      %p136 = scmp.ne.s32.totalorder %s119, %s135
      %p137 = scmp.eq.s32.totalorder %s31, 0
      %p138 = por %p136, %p137
      %s139 = ssub.s32 %s33, %s40
      %p140 = scmp.eq.s32.totalorder %s139, 0
      %s142 = sadd.s32 %s141, 1
      %s143 = scalar_select %p140, %s141, %s142
      %p146 = pneg %p140
      %p147 = scmp.eq.s32.totalorder %s25, 1
      %p148 = por %p146, %p147
      %p149 = scmp.ne.s32.totalorder %s141, %s144
      %p150 = scmp.eq.s32.totalorder %s25, 0
      %p151 = por %p149, %p150
      %p152 = scmp.ne.s32.totalorder %s141, %s144
      %p153 = scmp.eq.s32.totalorder %s30, 1
      %p154 = por %p152, %p153
      %p155 = scmp.ne.s32.totalorder %s144, %s145
      %p156 = scmp.eq.s32.totalorder %s30, 0
      %p157 = por %p155, %p156
      %p158 = scmp.ne.s32.totalorder %s144, %s145
      %p159 = scmp.eq.s32.totalorder %s31, 1
      %p160 = por %p158, %p159
      %p162 = scmp.ne.s32.totalorder %s145, %s161
      %p163 = scmp.eq.s32.totalorder %s31, 0
      %p164 = por %p162, %p163
      %s165 = ssub.s32 %s33, %s40
      %p166 = scmp.eq.s32.totalorder %s165, 0
      %s168 = sadd.s32 %s167, 1
      %s169 = scalar_select %p166, %s167, %s168
      %p172 = pneg %p166
      %p173 = scmp.eq.s32.totalorder %s25, 1
      %p174 = por %p172, %p173
      %p175 = scmp.ne.s32.totalorder %s167, %s170
      %p176 = scmp.eq.s32.totalorder %s25, 0
      %p177 = por %p175, %p176
      %p178 = scmp.ne.s32.totalorder %s167, %s170
      %p179 = scmp.eq.s32.totalorder %s30, 1
      %p180 = por %p178, %p179
      %p181 = scmp.ne.s32.totalorder %s170, %s171
      %p182 = scmp.eq.s32.totalorder %s30, 0
      %p183 = por %p181, %p182
      %p184 = scmp.ne.s32.totalorder %s170, %s171
      %p185 = scmp.eq.s32.totalorder %s31, 1
      %p186 = por %p184, %p185
      %p188 = scmp.ne.s32.totalorder %s171, %s187
      %p189 = scmp.eq.s32.totalorder %s31, 0
      %p190 = por %p188, %p189
      %s191 = ssub.s32 %s33, %s40
      %p192 = scmp.eq.s32.totalorder %s191, 0
      %s194 = sadd.s32 %s193, 1
      %s195 = scalar_select %p192, %s193, %s194
      %p198 = pneg %p192
      %p199 = scmp.eq.s32.totalorder %s25, 1
      %p200 = por %p198, %p199
      %p201 = scmp.ne.s32.totalorder %s193, %s196
      %p202 = scmp.eq.s32.totalorder %s25, 0
      %p203 = por %p201, %p202
      %p204 = scmp.ne.s32.totalorder %s193, %s196
      %p205 = scmp.eq.s32.totalorder %s30, 1
      %p206 = por %p204, %p205
      %p207 = scmp.ne.s32.totalorder %s196, %s197
      %p208 = scmp.eq.s32.totalorder %s30, 0
      %p209 = por %p207, %p208
      %p210 = scmp.ne.s32.totalorder %s196, %s197
      %p211 = scmp.eq.s32.totalorder %s31, 1
      %p212 = por %p210, %p211
      %p214 = scmp.ne.s32.totalorder %s197, %s213
      %p215 = scmp.eq.s32.totalorder %s31, 0
      %p216 = por %p214, %p215
      %s217 = ssub.s32 %s33, %s40
      %p218 = scmp.eq.s32.totalorder %s217, 0
      %s220 = sadd.s32 %s219, 1
      %s221 = scalar_select %p218, %s219, %s220
      %p224 = pneg %p218
      %p225 = scmp.eq.s32.totalorder %s25, 1
      %p226 = por %p224, %p225
      %p227 = scmp.ne.s32.totalorder %s219, %s222
      %p228 = scmp.eq.s32.totalorder %s25, 0
      %p229 = por %p227, %p228
      %p230 = scmp.ne.s32.totalorder %s219, %s222
      %p231 = scmp.eq.s32.totalorder %s30, 1
      %p232 = por %p230, %p231
      %p233 = scmp.ne.s32.totalorder %s222, %s223
      %p234 = scmp.eq.s32.totalorder %s30, 0
      %p235 = por %p233, %p234
      %p236 = scmp.ne.s32.totalorder %s222, %s223
      %p237 = scmp.eq.s32.totalorder %s31, 1
      %p238 = por %p236, %p237
      %p240 = scmp.ne.s32.totalorder %s223, %s239
      %p241 = scmp.eq.s32.totalorder %s31, 0
      %p242 = por %p240, %p241
      %s243 = ssub.s32 %s33, %s40
      %p244 = scmp.eq.s32.totalorder %s243, 0
      %s246 = sadd.s32 %s245, 1
      %s247 = scalar_select %p244, %s245, %s246
      %p250 = pneg %p244
      %p251 = scmp.eq.s32.totalorder %s25, 1
      %p252 = por %p250, %p251
      %p253 = scmp.ne.s32.totalorder %s245, %s248
      %p254 = scmp.eq.s32.totalorder %s25, 0
      %p255 = por %p253, %p254
      %p256 = scmp.ne.s32.totalorder %s245, %s248
      %p257 = scmp.eq.s32.totalorder %s30, 1
      %p258 = por %p256, %p257
      %p259 = scmp.ne.s32.totalorder %s248, %s249
      %p260 = scmp.eq.s32.totalorder %s30, 0
      %p261 = por %p259, %p260
      %p262 = scmp.ne.s32.totalorder %s248, %s249
      %p263 = scmp.eq.s32.totalorder %s31, 1
      %p264 = por %p262, %p263
      %p266 = scmp.ne.s32.totalorder %s249, %s265
      %p267 = scmp.eq.s32.totalorder %s31, 0
      %p268 = por %p266, %p267
      %s269 = ssub.s32 %s33, %s40
      %p270 = scmp.eq.s32.totalorder %s269, 0
      %s272 = sadd.s32 %s271, 1
      %s273 = scalar_select %p270, %s271, %s272
      %p276 = pneg %p270
      %p277 = scmp.eq.s32.totalorder %s25, 1
      %p278 = por %p276, %p277
      %p279 = scmp.ne.s32.totalorder %s271, %s274
      %p280 = scmp.eq.s32.totalorder %s25, 0
      %p281 = por %p279, %p280
      %p282 = scmp.ne.s32.totalorder %s271, %s274
      %p283 = scmp.eq.s32.totalorder %s30, 1
      %p284 = por %p282, %p283
      %p285 = scmp.ne.s32.totalorder %s274, %s275
      %p286 = scmp.eq.s32.totalorder %s30, 0
      %p287 = por %p285, %p286
      %p288 = scmp.ne.s32.totalorder %s274, %s275
      %p289 = scmp.eq.s32.totalorder %s31, 1
      %p290 = por %p288, %p289
      %p292 = scmp.ne.s32.totalorder %s275, %s291
      %p293 = scmp.eq.s32.totalorder %s31, 0
      %p294 = por %p292, %p293
      %s296 = sadd.s32 %s295, 1
      %p299 = scmp.eq.s32.totalorder %s25, 1
      %p300 = scmp.ne.s32.totalorder %s295, %s297
      %p301 = scmp.eq.s32.totalorder %s25, 0
      %p302 = por %p300, %p301
      %p303 = scmp.ne.s32.totalorder %s295, %s297
      %p304 = scmp.eq.s32.totalorder %s30, 1
      %p305 = por %p303, %p304
      %p306 = scmp.ne.s32.totalorder %s297, %s298
      %p307 = scmp.eq.s32.totalorder %s30, 0
      %p308 = por %p306, %p307
      %p309 = scmp.ne.s32.totalorder %s297, %s298
      %p310 = scmp.eq.s32.totalorder %s31, 1
      %p311 = por %p309, %p310
      %p313 = scmp.ne.s32.totalorder %s298, %s312
      %p314 = scmp.eq.s32.totalorder %s31, 0
      %p315 = por %p313, %p314
      %s317 = sadd.s32 %s316, 1
      %p320 = scmp.eq.s32.totalorder %s25, 1
      %p321 = scmp.ne.s32.totalorder %s316, %s318
      %p322 = scmp.eq.s32.totalorder %s25, 0
      %p323 = por %p321, %p322
      %p324 = scmp.ne.s32.totalorder %s316, %s318
      %p325 = scmp.eq.s32.totalorder %s30, 1
      %p326 = por %p324, %p325
      %p327 = scmp.ne.s32.totalorder %s318, %s319
      %p328 = scmp.eq.s32.totalorder %s30, 0
      %p329 = por %p327, %p328
      %p330 = scmp.ne.s32.totalorder %s318, %s319
      %p331 = scmp.eq.s32.totalorder %s31, 1
      %p332 = por %p330, %p331
      %p334 = scmp.ne.s32.totalorder %s319, %s333
      %p335 = scmp.eq.s32.totalorder %s31, 0
      %p336 = por %p334, %p335
      %s338 = sadd.s32 %s337, 1
      %p341 = scmp.eq.s32.totalorder %s25, 1
      %p342 = scmp.ne.s32.totalorder %s337, %s339
      %p343 = scmp.eq.s32.totalorder %s25, 0
      %p344 = por %p342, %p343
      %p345 = scmp.ne.s32.totalorder %s337, %s339
      %p346 = scmp.eq.s32.totalorder %s30, 1
      %p347 = por %p345, %p346
      %p348 = scmp.ne.s32.totalorder %s339, %s340
      %p349 = scmp.eq.s32.totalorder %s30, 0
      %p350 = por %p348, %p349
      %p351 = scmp.ne.s32.totalorder %s339, %s340
      %p352 = scmp.eq.s32.totalorder %s31, 1
      %p353 = por %p351, %p352
      %p355 = scmp.ne.s32.totalorder %s340, %s354
      %p356 = scmp.eq.s32.totalorder %s31, 0
      %p357 = por %p355, %p356
      %s359 = sadd.s32 %s358, 1
      %p362 = scmp.eq.s32.totalorder %s25, 1
      %p363 = scmp.ne.s32.totalorder %s358, %s360
      %p364 = scmp.eq.s32.totalorder %s25, 0
      %p365 = por %p363, %p364
      %p366 = scmp.ne.s32.totalorder %s358, %s360
      %p367 = scmp.eq.s32.totalorder %s30, 1
      %p368 = por %p366, %p367
      %p369 = scmp.ne.s32.totalorder %s360, %s361
      %p370 = scmp.eq.s32.totalorder %s30, 0
      %p371 = por %p369, %p370
      %p372 = scmp.ne.s32.totalorder %s360, %s361
      %p373 = scmp.eq.s32.totalorder %s31, 1
      %p374 = por %p372, %p373
      %p376 = scmp.ne.s32.totalorder %s361, %s375
      %p377 = scmp.eq.s32.totalorder %s31, 0
      %p378 = por %p376, %p377
      %s379 = ssub.s32 %s32, %s44
      %p380 = scmp.eq.s32.totalorder %s379, 0
      %s382 = sadd.s32 %s381, 1
      %s383 = scalar_select %p380, %s381, %s382
      %p386 = pneg %p380
      %p387 = scmp.eq.s32.totalorder %s25, 1
      %p388 = por %p386, %p387
      %p389 = scmp.ne.s32.totalorder %s381, %s384
      %p390 = scmp.eq.s32.totalorder %s25, 0
      %p391 = por %p389, %p390
      %p392 = scmp.ne.s32.totalorder %s381, %s384
      %p393 = scmp.eq.s32.totalorder %s30, 1
      %p394 = por %p392, %p393
      %p395 = scmp.ne.s32.totalorder %s384, %s385
      %p396 = scmp.eq.s32.totalorder %s30, 0
      %p397 = por %p395, %p396
      %p398 = scmp.ne.s32.totalorder %s384, %s385
      %p399 = scmp.eq.s32.totalorder %s31, 1
      %p400 = por %p398, %p399
      %p402 = scmp.ne.s32.totalorder %s385, %s401
      %p403 = scmp.eq.s32.totalorder %s31, 0
      %p404 = por %p402, %p403
      %p405 = scmp.le.s32.totalorder 1, %s25
      %p406 = scmp.lt.s32.totalorder %s25, 3
      %p407 = pnand %p405, %p406
      %p408 = pneg %p407
      // Predicated region
      $region9: #{tpu_custom_call.1} parent=5 // pred_check
        _
      $region10: #{tpu_custom_call.1} parent=5 // pred_check_branch
        %410 = sbr.rel (%p407) target = $region12
      $region11: #{tpu_custom_call.1} parent=5 // pred_region
        %s411 = ssub.s32 %s25, 1
        // Predicated region
        $region13: #{tpu_custom_call.1} parent=11 // pred_check
          %p412 = pneg %p63
        $region14: #{tpu_custom_call.1} parent=11 // pred_check_branch
          %414 = sbr.rel (%p412) target = $region16
        $region15: #{tpu_custom_call.1} parent=11 // pred_region
          %s415 = smul.u32 2, %s34
          %p416 = scmp.lt.s32.totalorder %s415, 1
          %s417 = scalar_select %p416, %s415, 1
          %s418 = smul.addr %s417, 8
          %s419 = scalar_lea.vmem %s0, %s418
          %s420 = smul.u32 2, %s34
        $region16: #{tpu_custom_call.1} parent=11 // pred_fallthru
          _
        // Predicated region
        $region17: #{tpu_custom_call.1} parent=11 // pred_check
          %p421 = pneg %p84
        $region18: #{tpu_custom_call.1} parent=11 // pred_check_branch
          %423 = sbr.rel (%p421) target = $region20
        $region19: #{tpu_custom_call.1} parent=11 // pred_region
          %425 = vsyncadd [#allocation7], 0
          %s426 = sshll.u32 %s1, 4
          %s427 = int_to_ptr.hbm [resolvable:$true] %s426
          %s428 = sshll.u32 [#allocation6], 4
          %s429 = int_to_ptr.vmem [resolvable:$true] %s428
          %434 = dma.hbm_to_vmem [thread:$0]  %s427, 128, %s429, [#allocation7], 64, 64, 4
        $region20: #{tpu_custom_call.1} parent=11 // pred_fallthru
          _
        // Predicated region
        $region21: #{tpu_custom_call.1} parent=11 // pred_check
          %p435 = pneg %p105
        $region22: #{tpu_custom_call.1} parent=11 // pred_check_branch
          %437 = sbr.rel (%p435) target = $region24
        $region23: #{tpu_custom_call.1} parent=11 // pred_region
          _
        $region24: #{tpu_custom_call.1} parent=11 // pred_fallthru
          _
        // Predicated region
        $region25: #{tpu_custom_call.1} parent=11 // pred_check
          %p438 = pneg %p308
        $region26: #{tpu_custom_call.1} parent=11 // pred_check_branch
          %440 = sbr.rel (%p438) target = $region28
        $region27: #{tpu_custom_call.1} parent=11 // pred_region
          _
        $region28: #{tpu_custom_call.1} parent=11 // pred_fallthru
          _
        // Predicated region
        $region29: #{tpu_custom_call.1} parent=11 // pred_check
          %p441 = pneg %p329
        $region30: #{tpu_custom_call.1} parent=11 // pred_check_branch
          %443 = sbr.rel (%p441) target = $region32
        $region31: #{tpu_custom_call.1} parent=11 // pred_region
          _
        $region32: #{tpu_custom_call.1} parent=11 // pred_fallthru
          _
        // Predicated region
        $region33: #{tpu_custom_call.1} parent=11 // pred_check
          %p444 = pneg %p350
        $region34: #{tpu_custom_call.1} parent=11 // pred_check_branch
          %446 = sbr.rel (%p444) target = $region36
        $region35: #{tpu_custom_call.1} parent=11 // pred_region
          _
        $region36: #{tpu_custom_call.1} parent=11 // pred_fallthru
          _
        // Predicated region
        $region37: #{tpu_custom_call.1} parent=11 // pred_check
          %p447 = pneg %p371
        $region38: #{tpu_custom_call.1} parent=11 // pred_check_branch
          %449 = sbr.rel (%p447) target = $region40
        $region39: #{tpu_custom_call.1} parent=11 // pred_region
          _
        $region40: #{tpu_custom_call.1} parent=11 // pred_fallthru
          _
      $region12: #{tpu_custom_call.1} parent=5 // pred_fallthru
        _
      %p450 = scmp.lt.s32.totalorder %s25, 2
      // Predicated region
      $region41: #{tpu_custom_call.1} parent=5 // pred_check
        %p451 = pneg %p450
      $region42: #{tpu_custom_call.1} parent=5 // pred_check_branch
        %453 = sbr.rel (%p451) target = $region44
      $region43: #{tpu_custom_call.1} parent=5 // pred_region
        // Predicated region
        $region45: #{tpu_custom_call.1} parent=43 // pred_check
          %p454 = pneg %p125
        $region46: #{tpu_custom_call.1} parent=43 // pred_check_branch
          %456 = sbr.rel (%p454) target = $region48
        $region47: #{tpu_custom_call.1} parent=43 // pred_region
          %p457 = scmp.lt.s32.totalorder %s33, 1
          %s458 = scalar_select %p457, %s33, 1
          %s459 = smul.addr %s458, 4
          %s460 = smul.addr %s459, 4
          %s461 = scalar_lea.vmem %s3, %s460
        $region48: #{tpu_custom_call.1} parent=43 // pred_fallthru
          _
        // Predicated region
        $region49: #{tpu_custom_call.1} parent=43 // pred_check
          %p462 = pneg %p151
        $region50: #{tpu_custom_call.1} parent=43 // pred_check_branch
          %464 = sbr.rel (%p462) target = $region52
        $region51: #{tpu_custom_call.1} parent=43 // pred_region
          %p465 = scmp.lt.s32.totalorder %s33, 1
          %s466 = scalar_select %p465, %s33, 1
          %s467 = scalar_lea.vmem %s4, %s466
        $region52: #{tpu_custom_call.1} parent=43 // pred_fallthru
          _
        // Predicated region
        $region53: #{tpu_custom_call.1} parent=43 // pred_check
          %p468 = pneg %p177
        $region54: #{tpu_custom_call.1} parent=43 // pred_check_branch
          %470 = sbr.rel (%p468) target = $region56
        $region55: #{tpu_custom_call.1} parent=43 // pred_region
          %p471 = scmp.lt.s32.totalorder %s33, 1
          %s472 = scalar_select %p471, %s33, 1
          %s473 = smul.addr %s472, 4
          %s474 = smul.addr %s473, 4
          %s475 = scalar_lea.vmem %s5, %s474
        $region56: #{tpu_custom_call.1} parent=43 // pred_fallthru
          _
        // Predicated region
        $region57: #{tpu_custom_call.1} parent=43 // pred_check
          %p476 = pneg %p203
        $region58: #{tpu_custom_call.1} parent=43 // pred_check_branch
          %478 = sbr.rel (%p476) target = $region60
        $region59: #{tpu_custom_call.1} parent=43 // pred_region
          %p479 = scmp.lt.s32.totalorder %s33, 1
          %s480 = scalar_select %p479, %s33, 1
          %s481 = smul.addr %s480, 4
          %s482 = smul.addr %s481, 4
          %s483 = scalar_lea.vmem %s6, %s482
        $region60: #{tpu_custom_call.1} parent=43 // pred_fallthru
          _
        // Predicated region
        $region61: #{tpu_custom_call.1} parent=43 // pred_check
          %p484 = pneg %p229
        $region62: #{tpu_custom_call.1} parent=43 // pred_check_branch
          %486 = sbr.rel (%p484) target = $region64
        $region63: #{tpu_custom_call.1} parent=43 // pred_region
          %p487 = scmp.lt.s32.totalorder %s33, 1
          %s488 = scalar_select %p487, %s33, 1
          %s489 = scalar_lea.vmem %s7, %s488
        $region64: #{tpu_custom_call.1} parent=43 // pred_fallthru
          _
        // Predicated region
        $region65: #{tpu_custom_call.1} parent=43 // pred_check
          %p490 = pneg %p255
        $region66: #{tpu_custom_call.1} parent=43 // pred_check_branch
          %492 = sbr.rel (%p490) target = $region68
        $region67: #{tpu_custom_call.1} parent=43 // pred_region
          %p493 = scmp.lt.s32.totalorder %s33, 1
          %s494 = scalar_select %p493, %s33, 1
          %s495 = smul.addr %s494, 8
          %s496 = smul.addr %s495, 4
          %s497 = scalar_lea.vmem %s8, %s496
        $region68: #{tpu_custom_call.1} parent=43 // pred_fallthru
          _
        // Predicated region
        $region69: #{tpu_custom_call.1} parent=43 // pred_check
          %p498 = pneg %p281
        $region70: #{tpu_custom_call.1} parent=43 // pred_check_branch
          %500 = sbr.rel (%p498) target = $region72
        $region71: #{tpu_custom_call.1} parent=43 // pred_region
          %p501 = scmp.lt.s32.totalorder %s33, 1
          %s502 = scalar_select %p501, %s33, 1
          %s503 = smul.addr %s502, 8
          %s504 = scalar_lea.vmem %s9, %s503
        $region72: #{tpu_custom_call.1} parent=43 // pred_fallthru
          _
      $region44: #{tpu_custom_call.1} parent=5 // pred_fallthru
        _
      %p505 = scmp.le.s32.totalorder 1, %s25
      %p506 = scmp.lt.s32.totalorder %s25, 3
      %p507 = pnand %p505, %p506
      %p508 = pneg %p507
      // Predicated region
      $region73: #{tpu_custom_call.1} parent=5 // pred_check
        _
      $region74: #{tpu_custom_call.1} parent=5 // pred_check_branch
        %510 = sbr.rel (%p507) target = $region76
      $region75: #{tpu_custom_call.1} parent=5 // pred_region
        %s511 = ssub.s32 %s25, 1
        // Predicated region
        $region77: #{tpu_custom_call.1} parent=75 // pred_check
          %p512 = pneg %p84
        $region78: #{tpu_custom_call.1} parent=75 // pred_check_branch
          %514 = sbr.rel (%p512) target = $region80
        $region79: #{tpu_custom_call.1} parent=75 // pred_region
          %516 = dma.done [#allocation7], 128
        $region80: #{tpu_custom_call.1} parent=75 // pred_fallthru
          _
        %s517 = smul.u32 2, %s34
        %p518 = scmp.lt.s32.totalorder %s517, 1
        %s519 = scalar_select %p518, %s517, 1
        %s520 = smul.addr %s519, 8
        %s521 = scalar_lea.vmem %s0, %s520
        %p522 = pneg %p63
        %p523 = pneg %p60
        %p524 = pneg %p84
        %p525 = pneg %p81
        %p526 = pneg %p105
        %p527 = pneg %p102
        %p528 = scmp.lt.s32.totalorder %s35, 1
        %s529 = scalar_select %p528, %s35, 1
        %s530 = smul.addr %s529, 4
        %s531 = smul.addr %s530, 4
        %s532 = scalar_lea.vmem %s3, %s531
        %p533 = pneg %p131
        %p534 = pneg %p128
        %p535 = scmp.lt.s32.totalorder %s35, 1
        %s536 = scalar_select %p535, %s35, 1
        %s537 = scalar_lea.vmem %s4, %s536
        %p538 = pneg %p157
        %p539 = pneg %p154
        %p540 = scmp.lt.s32.totalorder %s35, 1
        %s541 = scalar_select %p540, %s35, 1
        %s542 = smul.addr %s541, 4
        %s543 = smul.addr %s542, 4
        %s544 = scalar_lea.vmem %s5, %s543
        %p545 = pneg %p183
        %p546 = pneg %p180
        %p547 = scmp.lt.s32.totalorder %s35, 1
        %s548 = scalar_select %p547, %s35, 1
        %s549 = smul.addr %s548, 4
        %s550 = smul.addr %s549, 4
        %s551 = scalar_lea.vmem %s6, %s550
        %p552 = pneg %p209
        %p553 = pneg %p206
        %p554 = scmp.lt.s32.totalorder %s35, 1
        %s555 = scalar_select %p554, %s35, 1
        %s556 = scalar_lea.vmem %s7, %s555
        %p557 = pneg %p235
        %p558 = pneg %p232
        %p559 = scmp.lt.s32.totalorder %s35, 1
        %s560 = scalar_select %p559, %s35, 1
        %s561 = smul.addr %s560, 8
        %s562 = smul.addr %s561, 4
        %s563 = scalar_lea.vmem %s8, %s562
        %p564 = pneg %p261
        %p565 = pneg %p258
        %p566 = scmp.lt.s32.totalorder %s35, 1
        %s567 = scalar_select %p566, %s35, 1
        %s568 = smul.addr %s567, 8
        %s569 = scalar_lea.vmem %s9, %s568
        %p570 = pneg %p287
        %p571 = pneg %p284
        %p572 = pneg %p308
        %p573 = pneg %p305
        %p574 = pneg %p329
        %p575 = pneg %p326
        %p576 = pneg %p350
        %p577 = pneg %p347
        %p578 = pneg %p371
        %p579 = pneg %p368
        %p580 = pneg %p397
        %p581 = pneg %p394
        %p582 = scmp.lt.s32.totalorder %s34, 0
        %s583 = scalar_select %p582, %s34, 0
        %s584 = smul.addr %s583, 2
        %s585 = scalar_lea.vmem %s14, %s584
        %s586 = smul.u32 2, %s34
        %p587 = scmp.lt.s32.totalorder %s586, 1
        %s588 = scalar_select %p587, %s586, 1
        %s589 = smul.addr %s588, 8
        %s590 = scalar_lea.vmem %s0, %s589
        %s591 = smul.u32 2, %s34
        %p592 = scmp.lt.s32.totalorder %s35, 1
        %s593 = scalar_select %p592, %s35, 1
        %s594 = smul.addr %s593, 4
        %s595 = smul.addr %s594, 4
        %s596 = scalar_lea.vmem %s3, %s595
        %p597 = scmp.lt.s32.totalorder %s35, 1
        %s598 = scalar_select %p597, %s35, 1
        %s599 = scalar_lea.vmem %s4, %s598
        %p600 = scmp.lt.s32.totalorder %s35, 1
        %s601 = scalar_select %p600, %s35, 1
        %s602 = smul.addr %s601, 4
        %s603 = smul.addr %s602, 4
        %s604 = scalar_lea.vmem %s5, %s603
        %p605 = scmp.lt.s32.totalorder %s35, 1
        %s606 = scalar_select %p605, %s35, 1
        %s607 = smul.addr %s606, 4
        %s608 = smul.addr %s607, 4
        %s609 = scalar_lea.vmem %s6, %s608
        %p610 = scmp.lt.s32.totalorder %s35, 1
        %s611 = scalar_select %p610, %s35, 1
        %s612 = scalar_lea.vmem %s7, %s611
        %p613 = scmp.lt.s32.totalorder %s35, 1
        %s614 = scalar_select %p613, %s35, 1
        %s615 = smul.addr %s614, 8
        %s616 = smul.addr %s615, 4
        %s617 = scalar_lea.vmem %s8, %s616
        %p618 = scmp.lt.s32.totalorder %s35, 1
        %s619 = scalar_select %p618, %s35, 1
        %s620 = smul.addr %s619, 8
        %s621 = scalar_lea.vmem %s9, %s620
        %p622 = scmp.lt.s32.totalorder %s34, 0
        %s623 = scalar_select %p622, %s34, 0
        %s624 = smul.addr %s623, 2
        %s625 = scalar_lea.vmem %s14, %s624
        %p627 = scmp.eq.s32.totalorder %s35, 0
        // Predicated region
        $region81: #{tpu_custom_call.1} parent=75 // pred_check
          %p628 = pneg %p627
        $region82: #{tpu_custom_call.1} parent=75 // pred_check_branch
          %630 = sbr.rel (%p628) target = $region84
        $region83: #{tpu_custom_call.1} parent=75 // pred_region
          %v631 = vld [vmem:[%s590] sm:$0xff]
          %v632 = vld [vmem:[%s590 + $0x8] sm:$0xff]
          %v633 = vpack.c.bf16 %v632, %v631
          %v634 = vld [vmem:[#allocation6] sm:$0xf]
          %v635 = vld [vmem:[#allocation6 + $0x4] sm:$0xf]
          %v636 = vld [vmem:[%s2] sm:$0x1]
          %v638 = vperm.slane %v636, 0
          %v642 = vunpack.c.l.b16 %v634
          %v643 = vunpack.c.l.b16 %v635
          %v644 = vpack.c.b16 %v643, %v642
          %vm646 = vcmask 130048
          %v648 = vsel %vm646, %v633, 0
          %650 = vmatpush.bf16.msra.mxu0 0
          %651 = vmatpush.bf16.msra.mxu0 0
          %652 = vmatpush.bf16.msra.mxu0 0
          %653 = vmatpush.bf16.msra.mxu0 0
          %654 = vmatpush.bf16.msra.mxu0 0
          %655 = vmatpush.bf16.msra.mxu0 0
          %656 = vmatpush.bf16.msra.mxu0 0
          %657 = vmatpush.bf16.msra.mxu0 %v644
          %658 = vmatmul.bf16.gmra.mxu0 %v648
          %v659 = vpop.f32.mrf.mxu0
          %v660 = vadd.f32 %v638, %v659
          %v661 = vpop.f32.mrf.mxu0
          %v662 = vadd.f32 %v638, %v661
          %663 = vdwg.mxu0
          %v664 = vmul.f32 %v660, 5.656854
          %v665 = vmul.f32 %v662, 5.656854
          %vm666 = vcmask 261120
          %667 = vst.msk [vmem:[#allocation2] sm:$0xff] %vm666, %v664
          %668 = vst.msk [vmem:[#allocation2 + $0x8] sm:$0xff] %vm666, %v665
        $region84: #{tpu_custom_call.1} parent=75 // pred_fallthru
          _
        %v669 = vld [vmem:[#allocation2] sm:$0xff]
        %v670 = vld [vmem:[#allocation2 + $0x8] sm:$0xff]
        %v671 = vld [vmem:[%s621] sm:$0x3f]
        %v672 = vlaneseq
        %v673 = vshrl.u32 %v672, 7
        %v674 = vlaneseq
        %v675 = vand.u32 %v674, 127
        %vm676 = vcmp.gt.s32.totalorder %v675, %v673
        %v677 = vsel %vm676, -1e+30, 0.0
        %v678 = vpack.c.bf16 %v670, %v669
        %v679 = vld [vmem:[%s596] sm:$0xf]
        %v680 = vld [vmem:[%s596 + $0x4] sm:$0xf]
        %v681 = vld [vmem:[%s596 + $0x8] sm:$0xf]
        %v682 = vld [vmem:[%s596 + $0xc] sm:$0xf]
        %v683 = vld [vmem:[%s599] sm:$0x1]
        %v685 = vperm.slane %v683, 0
        %v691 = vunpack.c.l.b16 %v679
        %v692 = vunpack.c.l.b16 %v680
        %v693 = vunpack.c.l.b16 %v681
        %v694 = vunpack.c.l.b16 %v682
        %v695 = vpack.c.b16 %v692, %v691
        %v696 = vpack.c.b16 %v694, %v693
        %vm699 = vcmask 261120
        %v701 = vsel %vm699, %v678, 0
        %703 = vmatpush.bf16.msra.mxu0 0
        %704 = vmatpush.bf16.msra.mxu0 0
        %705 = vmatpush.bf16.msra.mxu0 0
        %706 = vmatpush.bf16.msra.mxu0 0
        %707 = vmatpush.bf16.msra.mxu0 0
        %708 = vmatpush.bf16.msra.mxu0 0
        %709 = vmatpush.bf16.msra.mxu0 %v696
        %710 = vmatpush.bf16.msra.mxu0 %v695
        %711 = vmatmul.bf16.gmra.mxu0 %v701
        %v712 = vpop.f32.mrf.mxu0
        %v713 = vadd.f32 %v685, %v712
        %v714 = vpop.f32.mrf.mxu0
        %v715 = vadd.f32 %v685, %v714
        %716 = vdwg.mxu0
        %v717 = vmul.f32 %v713, 0.25
        %v718 = vmul.f32 %v715, 0.25
        %v719 = vpack.c.bf16 %v717, %v717
        %v720 = vpack.c.bf16 %v718, %v718
        %v721 = vpack.c.bf16 %v713, %v713
        %v722 = vpack.c.bf16 %v715, %v715
        %v724 = vunpack.c.l.b16 %v721
        %v725 = vpack.c.b16 %v724, %v724
        %726 = vrot.lane.b32.xlu0 %v725, 96
        %v727 = vpop.permute.xlu0 %726
        %vm728 = vcmask 130048
        %v730 = vsel %vm728, %v719, 0
        %v733 = vsel %vm728, %v727, 0
        %735 = vmatpush.bf16.xpose.msra.mxu0 0
        %736 = vmatpush.bf16.xpose.msra.mxu0 0
        %737 = vmatpush.bf16.xpose.msra.mxu0 0
        %738 = vmatpush.bf16.xpose.msra.mxu0 0
        %739 = vmatpush.bf16.xpose.msra.mxu0 0
        %740 = vmatpush.bf16.xpose.msra.mxu0 0
        %741 = vmatpush.bf16.xpose.msra.mxu0 0
        %742 = vmatpush.bf16.xpose.msra.mxu0 %v733
        %743 = vmatmul.bf16.gmra.mxu0 %v730
        %v744 = vpop.f32.mrf.mxu0
        %v745 = vadd.f32 %v677, %v744
        %v746 = vpop.f32.mrf.mxu0
        %747 = vdwg.mxu0
        %v749 = vunpack.c.l.b16 %v722
        %v750 = vpack.c.b16 %v749, %v749
        %751 = vrot.lane.b32.xlu0 %v750, 96
        %v752 = vpop.permute.xlu0 %751
        %v754 = vsel %vm728, %v720, 0
        %v757 = vsel %vm728, %v752, 0
        %759 = vmatpush.bf16.xpose.msra.mxu0 0
        %760 = vmatpush.bf16.xpose.msra.mxu0 0
        %761 = vmatpush.bf16.xpose.msra.mxu0 0
        %762 = vmatpush.bf16.xpose.msra.mxu0 0
        %763 = vmatpush.bf16.xpose.msra.mxu0 0
        %764 = vmatpush.bf16.xpose.msra.mxu0 0
        %765 = vmatpush.bf16.xpose.msra.mxu0 0
        %766 = vmatpush.bf16.xpose.msra.mxu0 %v757
        %767 = vmatmul.bf16.gmra.mxu0 %v754
        %v768 = vpop.f32.mrf.mxu0
        %v769 = vadd.f32 %v677, %v768
        %v770 = vpop.f32.mrf.mxu0
        %771 = vdwg.mxu0
        %vm772 = vcmask 64512
        %v773 = vsel %vm772, %v745, -inf
        %774 = vmax.xlane.f32.xlu0 %v773
        %v775 = vpop.xlane.xlu0 %774
        %v776 = vsel %vm772, %v769, -inf
        %777 = vmax.xlane.f32.xlu0 %v776
        %v778 = vpop.xlane.xlu0 %777
        %v779 = vsub.f32 %v745, %v775
        %v780 = vsub.f32 %v769, %v778
        %v781 = vmul.f32 %v779, 1.442695
        %v782 = vpow.pop %v781
        %v783 = vmul.f32 %v780, 1.442695
        %v784 = vpow.pop %v783
        %v785 = vsel %vm772, %v782, 0.0
        %786 = vadd.xlane.f32.xlu0 %v785
        %v787 = vpop.xlane.xlu0 %786
        %v788 = vsel %vm772, %v784, 0.0
        %789 = vadd.xlane.f32.xlu0 %v788
        %v790 = vpop.xlane.xlu0 %789
        %v791 = vrcp.pop %v787
        %v792 = vrcp.pop %v790
        %v793 = vmul.f32 %v782, %v791
        %v794 = vmul.f32 %v784, %v792
        %v795 = vpack.c.bf16 %v793, %v793
        %v796 = vpack.c.bf16 %v794, %v794
        %797 = vrot.lane.b32.xlu0 %v725, 64
        %v798 = vpop.permute.xlu0 %797
        %v800 = vsel %vm772, %v795, 0
        %vm802 = vcmask 1043456
        %v804 = vsel %vm802, %v798, 0
        %806 = vmatpush.bf16.msra.mxu0 0
        %807 = vmatpush.bf16.msra.mxu0 0
        %808 = vmatpush.bf16.msra.mxu0 0
        %809 = vmatpush.bf16.msra.mxu0 0
        %810 = vmatpush.bf16.msra.mxu0 0
        %811 = vmatpush.bf16.msra.mxu0 0
        %812 = vmatpush.bf16.msra.mxu0 0
        %813 = vmatpush.bf16.msra.mxu0 %v804
        %814 = vmatmul.bf16.gmra.mxu0 %v800
        %v815 = vpop.f32.mrf.mxu0
        %v816 = vadd.f32 0.0, %v815
        %v817 = vpop.f32.mrf.mxu0
        %818 = vdwg.mxu0
        %819 = vrot.lane.b32.xlu0 %v750, 64
        %v820 = vpop.permute.xlu0 %819
        %v822 = vsel %vm772, %v796, 0
        %v825 = vsel %vm802, %v820, 0
        %827 = vmatpush.bf16.msra.mxu0 0
        %828 = vmatpush.bf16.msra.mxu0 0
        %829 = vmatpush.bf16.msra.mxu0 0
        %830 = vmatpush.bf16.msra.mxu0 0
        %831 = vmatpush.bf16.msra.mxu0 0
        %832 = vmatpush.bf16.msra.mxu0 0
        %833 = vmatpush.bf16.msra.mxu0 0
        %834 = vmatpush.bf16.msra.mxu0 %v825
        %835 = vmatmul.bf16.gmra.mxu0 %v822
        %v836 = vpop.f32.mrf.mxu0
        %v837 = vadd.f32 0.0, %v836
        %v838 = vpop.f32.mrf.mxu0
        %839 = vdwg.mxu0
        %840 = vst.msk [vmem:[#allocation3] sm:$0xff] %vm728, %v816
        %841 = vst.msk [vmem:[#allocation3 + $0x8] sm:$0xff] %vm728, %v837
        %v843 = vunpack.c.l.b16 %v719
        %v844 = vpack.c.b16 %v843, %v843
        %845 = vrot.lane.b32.xlu0 %v844, 112
        %v846 = vpop.permute.xlu0 %845
        %847 = vrot.lane.b32.xlu0 %v725, 80
        %v848 = vpop.permute.xlu0 %847
        %v850 = vsel %vm728, %v846, 0
        %v853 = vsel %vm728, %v848, 0
        %855 = vmatpush.bf16.xpose.msra.mxu0 0
        %856 = vmatpush.bf16.xpose.msra.mxu0 0
        %857 = vmatpush.bf16.xpose.msra.mxu0 0
        %858 = vmatpush.bf16.xpose.msra.mxu0 0
        %859 = vmatpush.bf16.xpose.msra.mxu0 0
        %860 = vmatpush.bf16.xpose.msra.mxu0 0
        %861 = vmatpush.bf16.xpose.msra.mxu0 0
        %862 = vmatpush.bf16.xpose.msra.mxu0 %v853
        %863 = vmatmul.bf16.gmra.mxu0 %v850
        %v864 = vpop.f32.mrf.mxu0
        %v865 = vadd.f32 %v677, %v864
        %v866 = vpop.f32.mrf.mxu0
        %867 = vdwg.mxu0
        %v869 = vunpack.c.l.b16 %v720
        %v870 = vpack.c.b16 %v869, %v869
        %871 = vrot.lane.b32.xlu0 %v870, 112
        %v872 = vpop.permute.xlu0 %871
        %873 = vrot.lane.b32.xlu0 %v750, 80
        %v874 = vpop.permute.xlu0 %873
        %v876 = vsel %vm728, %v872, 0
        %v879 = vsel %vm728, %v874, 0
        %881 = vmatpush.bf16.xpose.msra.mxu0 0
        %882 = vmatpush.bf16.xpose.msra.mxu0 0
        %883 = vmatpush.bf16.xpose.msra.mxu0 0
        %884 = vmatpush.bf16.xpose.msra.mxu0 0
        %885 = vmatpush.bf16.xpose.msra.mxu0 0
        %886 = vmatpush.bf16.xpose.msra.mxu0 0
        %887 = vmatpush.bf16.xpose.msra.mxu0 0
        %888 = vmatpush.bf16.xpose.msra.mxu0 %v879
        %889 = vmatmul.bf16.gmra.mxu0 %v876
        %v890 = vpop.f32.mrf.mxu0
        %v891 = vadd.f32 %v677, %v890
        %v892 = vpop.f32.mrf.mxu0
        %893 = vdwg.mxu0
        %v894 = vsel %vm772, %v865, -inf
        %895 = vmax.xlane.f32.xlu0 %v894
        %v896 = vpop.xlane.xlu0 %895
        %v897 = vsel %vm772, %v891, -inf
        %898 = vmax.xlane.f32.xlu0 %v897
        %v899 = vpop.xlane.xlu0 %898
        %v900 = vsub.f32 %v865, %v896
        %v901 = vsub.f32 %v891, %v899
        %v902 = vmul.f32 %v900, 1.442695
        %v903 = vpow.pop %v902
        %v904 = vmul.f32 %v901, 1.442695
        %v905 = vpow.pop %v904
        %v906 = vsel %vm772, %v903, 0.0
        %907 = vadd.xlane.f32.xlu0 %v906
        %v908 = vpop.xlane.xlu0 %907
        %v909 = vsel %vm772, %v905, 0.0
        %910 = vadd.xlane.f32.xlu0 %v909
        %v911 = vpop.xlane.xlu0 %910
        %v912 = vrcp.pop %v908
        %v913 = vrcp.pop %v911
        %v914 = vmul.f32 %v903, %v912
        %v915 = vmul.f32 %v905, %v913
        %v916 = vpack.c.bf16 %v914, %v914
        %v917 = vpack.c.bf16 %v915, %v915
        %918 = vrot.lane.b32.xlu0 %v725, 48
        %v919 = vpop.permute.xlu0 %918
        %v921 = vsel %vm772, %v916, 0
        %v924 = vsel %vm802, %v919, 0
        %926 = vmatpush.bf16.msra.mxu0 0
        %927 = vmatpush.bf16.msra.mxu0 0
        %928 = vmatpush.bf16.msra.mxu0 0
        %929 = vmatpush.bf16.msra.mxu0 0
        %930 = vmatpush.bf16.msra.mxu0 0
        %931 = vmatpush.bf16.msra.mxu0 0
        %932 = vmatpush.bf16.msra.mxu0 0
        %933 = vmatpush.bf16.msra.mxu0 %v924
        %934 = vmatmul.bf16.gmra.mxu0 %v921
        %v935 = vpop.f32.mrf.mxu0
        %v936 = vadd.f32 0.0, %v935
        %v937 = vpop.f32.mrf.mxu0
        %938 = vdwg.mxu0
        %939 = vrot.lane.b32.xlu0 %v750, 48
        %v940 = vpop.permute.xlu0 %939
        %v942 = vsel %vm772, %v917, 0
        %v945 = vsel %vm802, %v940, 0
        %947 = vmatpush.bf16.msra.mxu0 0
        %948 = vmatpush.bf16.msra.mxu0 0
        %949 = vmatpush.bf16.msra.mxu0 0
        %950 = vmatpush.bf16.msra.mxu0 0
        %951 = vmatpush.bf16.msra.mxu0 0
        %952 = vmatpush.bf16.msra.mxu0 0
        %953 = vmatpush.bf16.msra.mxu0 0
        %954 = vmatpush.bf16.msra.mxu0 %v945
        %955 = vmatmul.bf16.gmra.mxu0 %v942
        %v956 = vpop.f32.mrf.mxu0
        %v957 = vadd.f32 0.0, %v956
        %v958 = vpop.f32.mrf.mxu0
        %959 = vdwg.mxu0
        %962 = vrot.lane.b32.xlu0 %v936, 16
        %v963 = vpop.permute.xlu0 %962
        %964 = vrot.lane.b32.xlu0 %v957, 16
        %v965 = vpop.permute.xlu0 %964
        %vm968 = vcmask 261248
        %969 = vst.msk [vmem:[#allocation3] sm:$0xff] %vm968, %v963
        %970 = vst.msk [vmem:[#allocation3 + $0x8] sm:$0xff] %vm968, %v965
        %v971 = vld [vmem:[#allocation3] sm:$0xff]
        %v972 = vld [vmem:[#allocation3 + $0x8] sm:$0xff]
        %v973 = vpack.c.bf16 %v972, %v971
        %v974 = vld [vmem:[%s604] sm:$0xf]
        %v975 = vld [vmem:[%s604 + $0x4] sm:$0xf]
        %v976 = vld [vmem:[%s604 + $0x8] sm:$0xf]
        %v977 = vld [vmem:[%s604 + $0xc] sm:$0xf]
        %v978 = vperm.slane %v671, 0
        %v983 = vunpack.c.l.b16 %v974
        %v984 = vunpack.c.l.b16 %v975
        %v985 = vunpack.c.l.b16 %v976
        %v986 = vunpack.c.l.b16 %v977
        %v987 = vpack.c.b16 %v984, %v983
        %v988 = vpack.c.b16 %v986, %v985
        %v992 = vsel %vm699, %v973, 0
        %994 = vmatpush.bf16.msra.mxu0 0
        %995 = vmatpush.bf16.msra.mxu0 0
        %996 = vmatpush.bf16.msra.mxu0 0
        %997 = vmatpush.bf16.msra.mxu0 0
        %998 = vmatpush.bf16.msra.mxu0 0
        %999 = vmatpush.bf16.msra.mxu0 0
        %1000 = vmatpush.bf16.msra.mxu0 %v988
        %1001 = vmatpush.bf16.msra.mxu0 %v987
        %1002 = vmatmul.bf16.gmra.mxu0 %v992
        %v1003 = vpop.f32.mrf.mxu0
        %v1004 = vadd.f32 %v978, %v1003
        %v1005 = vpop.f32.mrf.mxu0
        %v1006 = vadd.f32 %v978, %v1005
        %1007 = vdwg.mxu0
        %v1008 = vadd.f32 %v669, %v1004
        %v1009 = vadd.f32 %v670, %v1006
        %v1010 = vsel %vm699, %v1008, 0.0
        %1011 = vadd.xlane.f32.xlu0 %v1010
        %v1012 = vpop.xlane.xlu0 %1011
        %v1013 = vsel %vm699, %v1009, 0.0
        %1014 = vadd.xlane.f32.xlu0 %v1013
        %v1015 = vpop.xlane.xlu0 %1014
        %v1016 = vrcp.pop 32.0
        %v1017 = vmul.f32 32.0, %v1016
        %v1018 = vsub.f32 1.0, %v1017
        %v1019 = vmul.f32 %v1016, %v1018
        %v1020 = vadd.f32 %v1016, %v1019
        %vm1021 = vweird.f32 %v1016
        %v1022 = vsel %vm1021, %v1016, %v1020
        %v1023 = vmul.f32 %v1012, %v1022
        %v1024 = vmul.f32 %v1015, %v1022
        %v1025 = vsub.f32 %v1008, %v1023
        %v1026 = vsub.f32 %v1009, %v1024
        %v1027 = vmul.f32 %v1025, %v1025
        %v1028 = vmul.f32 %v1026, %v1026
        %v1029 = vsel %vm699, %v1027, 0.0
        %1030 = vadd.xlane.f32.xlu0 %v1029
        %v1031 = vpop.xlane.xlu0 %1030
        %v1032 = vsel %vm699, %v1028, 0.0
        %1033 = vadd.xlane.f32.xlu0 %v1032
        %v1034 = vpop.xlane.xlu0 %1033
        %v1035 = vmul.f32 %v1031, %v1022
        %v1036 = vmul.f32 %v1034, %v1022
        %v1037 = vadd.f32 %v1035, 1e-05
        %v1038 = vadd.f32 %v1036, 1e-05
        %v1039 = vrsqrt.pop %v1037
        %v1040 = vmul.f32 %v1039, %v1037
        %v1041 = vmul.f32 %v1040, %v1039
        %v1042 = vmul.f32 0.5, %v1041
        %v1043 = vsub.f32 1.5, %v1042
        %v1044 = vmul.f32 %v1039, %v1043
        %vm1045 = vweird.f32 %v1037
        %vm1046 = vweird.f32 %v1039
        %vm1047 = vmor %vm1045, %vm1046
        %v1048 = vsel %vm1047, %v1039, %v1044
        %v1049 = vrsqrt.pop %v1038
        %v1050 = vmul.f32 %v1049, %v1038
        %v1051 = vmul.f32 %v1050, %v1049
        %v1052 = vmul.f32 0.5, %v1051
        %v1053 = vsub.f32 1.5, %v1052
        %v1054 = vmul.f32 %v1049, %v1053
        %vm1055 = vweird.f32 %v1038
        %vm1056 = vweird.f32 %v1049
        %vm1057 = vmor %vm1055, %vm1056
        %v1058 = vsel %vm1057, %v1049, %v1054
        %v1059 = vmul.f32 %v1025, %v1048
        %v1060 = vmul.f32 %v1026, %v1058
        %v1061 = vperm.slane %v671, 1
        %v1062 = vmul.f32 %v1059, %v1061
        %v1063 = vmul.f32 %v1060, %v1061
        %v1064 = vperm.slane %v671, 2
        %v1065 = vadd.f32 %v1062, %v1064
        %v1066 = vadd.f32 %v1063, %v1064
        %v1067 = vpack.c.bf16 %v1066, %v1065
        %v1068 = vld [vmem:[%s609] sm:$0xf]
        %v1069 = vld [vmem:[%s609 + $0x4] sm:$0xf]
        %v1070 = vld [vmem:[%s609 + $0x8] sm:$0xf]
        %v1071 = vld [vmem:[%s609 + $0xc] sm:$0xf]
        %v1072 = vld [vmem:[%s612] sm:$0x1]
        %v1074 = vperm.slane %v1072, 0
        %v1080 = vunpack.c.l.b16 %v1068
        %v1081 = vunpack.c.l.b16 %v1069
        %v1082 = vunpack.c.l.b16 %v1070
        %v1083 = vunpack.c.l.b16 %v1071
        %v1084 = vpack.c.b16 %v1081, %v1080
        %v1085 = vpack.c.b16 %v1083, %v1082
        %v1089 = vsel %vm699, %v1067, 0
        %1091 = vmatpush.bf16.msra.mxu0 0
        %1092 = vmatpush.bf16.msra.mxu0 0
        %1093 = vmatpush.bf16.msra.mxu0 0
        %1094 = vmatpush.bf16.msra.mxu0 0
        %1095 = vmatpush.bf16.msra.mxu0 0
        %1096 = vmatpush.bf16.msra.mxu0 0
        %1097 = vmatpush.bf16.msra.mxu0 %v1085
        %1098 = vmatpush.bf16.msra.mxu0 %v1084
        %1099 = vmatmul.bf16.gmra.mxu0 %v1089
        %v1100 = vpop.f32.mrf.mxu0
        %v1101 = vadd.f32 %v1074, %v1100
        %v1102 = vpop.f32.mrf.mxu0
        %v1103 = vadd.f32 %v1074, %v1102
        %1104 = vdwg.mxu0
        %v1105 = vmax.f32 %v1101, 0.0
        %v1106 = vmax.f32 %v1103, 0.0
        %v1107 = vpack.c.bf16 %v1106, %v1105
        %v1108 = vld [vmem:[%s617] sm:$0xf]
        %v1109 = vld [vmem:[%s617 + $0x4] sm:$0xf]
        %v1110 = vld [vmem:[%s617 + $0x8] sm:$0xf]
        %v1111 = vld [vmem:[%s617 + $0xc] sm:$0xf]
        %v1112 = vld [vmem:[%s617 + $0x10] sm:$0xf]
        %v1113 = vld [vmem:[%s617 + $0x14] sm:$0xf]
        %v1114 = vld [vmem:[%s617 + $0x18] sm:$0xf]
        %v1115 = vld [vmem:[%s617 + $0x1c] sm:$0xf]
        %v1116 = vperm.slane %v671, 3
        %v1125 = vunpack.c.l.b16 %v1108
        %v1126 = vunpack.c.l.b16 %v1109
        %v1127 = vunpack.c.l.b16 %v1110
        %v1128 = vunpack.c.l.b16 %v1111
        %v1129 = vunpack.c.l.b16 %v1112
        %v1130 = vunpack.c.l.b16 %v1113
        %v1131 = vunpack.c.l.b16 %v1114
        %v1132 = vunpack.c.l.b16 %v1115
        %v1133 = vpack.c.b16 %v1126, %v1125
        %v1134 = vpack.c.b16 %v1128, %v1127
        %v1135 = vpack.c.b16 %v1130, %v1129
        %v1136 = vpack.c.b16 %v1132, %v1131
        %vm1141 = vcmask 523264
        %v1143 = vsel %vm1141, %v1107, 0
        %1145 = vmatpush.bf16.msra.mxu0 0
        %1146 = vmatpush.bf16.msra.mxu0 0
        %1147 = vmatpush.bf16.msra.mxu0 0
        %1148 = vmatpush.bf16.msra.mxu0 0
        %1149 = vmatpush.bf16.msra.mxu0 %v1136
        %1150 = vmatpush.bf16.msra.mxu0 %v1135
        %1151 = vmatpush.bf16.msra.mxu0 %v1134
        %1152 = vmatpush.bf16.msra.mxu0 %v1133
        %1153 = vmatmul.bf16.gmra.mxu0 %v1143
        %v1154 = vpop.f32.mrf.mxu0
        %v1155 = vadd.f32 %v1116, %v1154
        %v1156 = vpop.f32.mrf.mxu0
        %v1157 = vadd.f32 %v1116, %v1156
        %1158 = vdwg.mxu0
        %v1159 = vadd.f32 %v1065, %v1155
        %v1160 = vadd.f32 %v1066, %v1157
        %v1161 = vsel %vm699, %v1159, 0.0
        %1162 = vadd.xlane.f32.xlu0 %v1161
        %v1163 = vpop.xlane.xlu0 %1162
        %v1164 = vsel %vm699, %v1160, 0.0
        %1165 = vadd.xlane.f32.xlu0 %v1164
        %v1166 = vpop.xlane.xlu0 %1165
        %v1167 = vmul.f32 %v1163, %v1022
        %v1168 = vmul.f32 %v1166, %v1022
        %v1169 = vsub.f32 %v1159, %v1167
        %v1170 = vsub.f32 %v1160, %v1168
        %v1171 = vmul.f32 %v1169, %v1169
        %v1172 = vmul.f32 %v1170, %v1170
        %v1173 = vsel %vm699, %v1171, 0.0
        %1174 = vadd.xlane.f32.xlu0 %v1173
        %v1175 = vpop.xlane.xlu0 %1174
        %v1176 = vsel %vm699, %v1172, 0.0
        %1177 = vadd.xlane.f32.xlu0 %v1176
        %v1178 = vpop.xlane.xlu0 %1177
        %v1179 = vmul.f32 %v1175, %v1022
        %v1180 = vmul.f32 %v1178, %v1022
        %v1181 = vadd.f32 %v1179, 1e-05
        %v1182 = vadd.f32 %v1180, 1e-05
        %v1183 = vrsqrt.pop %v1181
        %v1184 = vmul.f32 %v1183, %v1181
        %v1185 = vmul.f32 %v1184, %v1183
        %v1186 = vmul.f32 0.5, %v1185
        %v1187 = vsub.f32 1.5, %v1186
        %v1188 = vmul.f32 %v1183, %v1187
        %vm1189 = vweird.f32 %v1181
        %vm1190 = vweird.f32 %v1183
        %vm1191 = vmor %vm1189, %vm1190
        %v1192 = vsel %vm1191, %v1183, %v1188
        %v1193 = vrsqrt.pop %v1182
        %v1194 = vmul.f32 %v1193, %v1182
        %v1195 = vmul.f32 %v1194, %v1193
        %v1196 = vmul.f32 0.5, %v1195
        %v1197 = vsub.f32 1.5, %v1196
        %v1198 = vmul.f32 %v1193, %v1197
        %vm1199 = vweird.f32 %v1182
        %vm1200 = vweird.f32 %v1193
        %vm1201 = vmor %vm1199, %vm1200
        %v1202 = vsel %vm1201, %v1193, %v1198
        %v1203 = vmul.f32 %v1169, %v1192
        %v1204 = vmul.f32 %v1170, %v1202
        %v1205 = vperm.slane %v671, 4
        %v1206 = vmul.f32 %v1203, %v1205
        %v1207 = vmul.f32 %v1204, %v1205
        %v1208 = vperm.slane %v671, 5
        %v1209 = vadd.f32 %v1206, %v1208
        %v1210 = vadd.f32 %v1207, %v1208
        %1211 = vst.msk [vmem:[#allocation2] sm:$0xff] %vm699, %v1209
        %1212 = vst.msk [vmem:[#allocation2 + $0x8] sm:$0xff] %vm699, %v1210
        %p1213 = scmp.eq.s32.totalorder %s35, 1
        // Predicated region
        $region85: #{tpu_custom_call.1} parent=75 // pred_check
          %p1214 = pneg %p1213
        $region86: #{tpu_custom_call.1} parent=75 // pred_check_branch
          %1216 = sbr.rel (%p1214) target = $region88
        $region87: #{tpu_custom_call.1} parent=75 // pred_region
          %v1217 = vpack.c.bf16 %v1210, %v1209
          %v1218 = vld [vmem:[%s10] sm:$0xf]
          %v1219 = vld [vmem:[%s10 + $0x4] sm:$0xf]
          %v1220 = vld [vmem:[%s10 + $0x8] sm:$0xf]
          %v1221 = vld [vmem:[%s10 + $0xc] sm:$0xf]
          %v1222 = vld [vmem:[#allocation4] sm:$0x1]
          %v1224 = vperm.slane %v1222, 0
          %v1230 = vunpack.c.l.b16 %v1218
          %v1231 = vunpack.c.l.b16 %v1219
          %v1232 = vunpack.c.l.b16 %v1220
          %v1233 = vunpack.c.l.b16 %v1221
          %v1234 = vpack.c.b16 %v1231, %v1230
          %v1235 = vpack.c.b16 %v1233, %v1232
          %v1239 = vsel %vm699, %v1217, 0
          %1241 = vmatpush.bf16.msra.mxu0 0
          %1242 = vmatpush.bf16.msra.mxu0 0
          %1243 = vmatpush.bf16.msra.mxu0 0
          %1244 = vmatpush.bf16.msra.mxu0 0
          %1245 = vmatpush.bf16.msra.mxu0 0
          %1246 = vmatpush.bf16.msra.mxu0 0
          %1247 = vmatpush.bf16.msra.mxu0 %v1235
          %1248 = vmatpush.bf16.msra.mxu0 %v1234
          %1249 = vmatmul.bf16.gmra.mxu0 %v1239
          %v1250 = vpop.f32.mrf.mxu0
          %v1251 = vadd.f32 %v1224, %v1250
          %v1252 = vpop.f32.mrf.mxu0
          %v1253 = vadd.f32 %v1224, %v1252
          %1254 = vdwg.mxu0
          %v1255 = vld [vmem:[%s12] sm:$0xff]
          %v1256 = vld [vmem:[#allocation5] sm:$0x1]
          %v1258 = vperm.slane %v1256, 0
          %1262 = vset.pattern.permute.xlu0 0
          %1263 = vperm.xlu0 %1262, %v1251
          %v1264 = vpop.permute.xlu0 %1263
          %1265 = vset.pattern.permute.xlu0 0
          %1266 = vperm.xlu0 %1265, %v1253
          %v1267 = vpop.permute.xlu0 %1266
          %v1268 = vperm.slane %v1264, %v675
          %v1269 = vperm.slane %v1267, %v675
          %vm1270 = vcmask 1041409
          %v1271 = vsel %vm1270, %v1269, %v1268
          %v1272 = vsel %vm772, %v1271, 0
          %1274 = vmatpush.msra.mxu0 0.0
          %1275 = vmatpush.msra.mxu0 0.0
          %1276 = vmatpush.msra.mxu0 0.0
          %1277 = vmatpush.msra.mxu0 0.0
          %1278 = vmatpush.msra.mxu0 0.0
          %1279 = vmatpush.msra.mxu0 0.0
          %1280 = vmatpush.msra.mxu0 0.0
          %1281 = vmatpush.msra.mxu0 0.0
          %1282 = vmatpush.msra.mxu0 0.0
          %1283 = vmatpush.msra.mxu0 0.0
          %1284 = vmatpush.msra.mxu0 0.0
          %1285 = vmatpush.msra.mxu0 0.0
          %1286 = vmatpush.msra.mxu0 0.0
          %1287 = vmatpush.msra.mxu0 0.0
          %1288 = vmatpush.msra.mxu0 0.0
          %1289 = vmatpush.msra.mxu0 %v1255
          %1290 = vmatmul.f32.gmra.mxu0 %v1272
          %v1291 = vpop.f32.mrf.mxu0
          %v1292 = vadd.f32 %v1258, %v1291
          %1293 = vdwg.mxu0
          %v1294 = vsub.f32 0.0, %v1292
          %v1295 = vmul.f32 %v1294, 1.442695
          %v1296 = vpow.pop %v1295
          %v1297 = vadd.f32 %v1296, 1.0
          %v1298 = vrcp.pop %v1297
          %v1299 = vmul.f32 %v1297, %v1298
          %v1300 = vsub.f32 1.0, %v1299
          %v1301 = vmul.f32 %v1298, %v1300
          %v1302 = vadd.f32 %v1298, %v1301
          %vm1303 = vweird.f32 %v1297
          %vm1304 = vweird.f32 %v1298
          %vm1305 = vmor %vm1303, %vm1304
          %v1306 = vsel %vm1305, %v1298, %v1302
          %v1307 = vand.u32 2147483647, %v1297
          %vm1308 = vcmp.eq.f32.partialorder %v1307, 8.507059e+37
          %v1309 = vand.u32 %v1297, 2147483648
          %v1310 = vor.u32 1.1754944e-38, %v1309
          %v1311 = vsel %vm1308, %v1310, %v1306
          %v1312 = vmul.f32 1.0, %v1311
          %vm1313 = vcmask 1024
          %1314 = vst.msk [vmem:[%s625] sm:$0x3] %vm1313, %v1312
        $region88: #{tpu_custom_call.1} parent=75 // pred_fallthru
          _
        %p1315 = scmp.lt.s32.totalorder %s34, 0
        %s1316 = scalar_select %p1315, %s34, 0
        %s1317 = smul.addr %s1316, 2
        %s1318 = scalar_lea.vmem %s14, %s1317
        // Predicated region
        $region89: #{tpu_custom_call.1} parent=75 // pred_check
          %p1319 = pneg %p394
        $region90: #{tpu_custom_call.1} parent=75 // pred_check_branch
          %1321 = sbr.rel (%p1319) target = $region92
        $region91: #{tpu_custom_call.1} parent=75 // pred_region
          _
        $region92: #{tpu_custom_call.1} parent=75 // pred_fallthru
          _
        // Predicated region
        $region93: #{tpu_custom_call.1} parent=75 // pred_check
          %p1322 = pneg %p394
        $region94: #{tpu_custom_call.1} parent=75 // pred_check_branch
          %1324 = sbr.rel (%p1322) target = $region96
        $region95: #{tpu_custom_call.1} parent=75 // pred_region
          %p1325 = scmp.lt.s32.totalorder %s34, 0
          %s1326 = scalar_select %p1325, %s34, 0
          %s1327 = smul.addr %s1326, 2
          %s1328 = scalar_lea.vmem %s14, %s1327
        $region96: #{tpu_custom_call.1} parent=75 // pred_fallthru
          _
      $region76: #{tpu_custom_call.1} parent=5 // pred_fallthru
        _
      %p1329 = scmp.le.s32.totalorder 2, %s25
      // Predicated region
      $region97: #{tpu_custom_call.1} parent=5 // pred_check
        %p1330 = pneg %p1329
      $region98: #{tpu_custom_call.1} parent=5 // pred_check_branch
        %1332 = sbr.rel (%p1330) target = $region100
      $region99: #{tpu_custom_call.1} parent=5 // pred_region
        %s1333 = ssub.s32 %s25, 2
      $region100: #{tpu_custom_call.1} parent=5 // pred_fallthru
        _
    $region6: #{tpu_custom_call.1} parent=1 // loop_footer
      %s29 = sadd.s32 1, %s25
    $region7: #{tpu_custom_call.1} parent=1 // loop_footer_branch
      %24 = sbr.rel target = $region3
    $region8: #{tpu_custom_call.1} parent=1 // loop_exit
      _
    %1334 = vsyncpa [#allocation7], 1
    %s1335 = scalar_lea.sflag [#allocation7], 1
    %1336 = vsyncpa %s1335, 1

</llo_original>
